<compile_context>
chip_gen: v7x
topology: tpu7x:2x2x1
jax: 0.10.0
libtpu: 0.0.40
codegen_flags: <defaults>
</compile_context>

<pallas_src>
import jax
import jax.numpy as jnp
from jax.experimental import pallas as pl
from jax.experimental.pallas import tpu as pltpu

LANE = 128            # pad every feature dim to a multiple of the 128-lane vreg width
SUBLANE_BF16 = 16     # bf16 packs 16 rows per vreg -> batch_tile must be a multiple


def _round_up(x, m):
    return (x + m - 1) // m * m


def fc5_kernel(x_ref,
               w1_ref, b1_ref, w2_ref, b2_ref, w3_ref, b3_ref,
               w4_ref, b4_ref, w5_ref, b5_ref, w6_ref, b6_ref,
               o_ref):
    """Fused forward: 5 x (Linear -> ReLU) followed by a final Linear.

    Matmul operands are bf16; accumulation and all elementwise work are f32.
    """
    h = x_ref[...]                       # bf16 [batch_tile, in_pad]

    def linear_relu(h_bf16, w_ref, b_ref):
        y = jnp.dot(h_bf16, w_ref[...], preferred_element_type=jnp.float32)
        y = y + b_ref[...]               # (1, out_pad) f32 bias, broadcasts over rows
        y = jnp.maximum(y, 0.0)          # f32 ReLU on the VPU
        return y.astype(jnp.bfloat16)    # back to bf16 for the next MXU pass

    h = linear_relu(h, w1_ref, b1_ref)
    h = linear_relu(h, w2_ref, b2_ref)
    h = linear_relu(h, w3_ref, b3_ref)
    h = linear_relu(h, w4_ref, b4_ref)
    h = linear_relu(h, w5_ref, b5_ref)

    # Final layer: no ReLU.
    y = jnp.dot(h, w6_ref[...], preferred_element_type=jnp.float32)
    y = y + b6_ref[...]
    o_ref[...] = y.astype(o_ref.dtype)


def fc5_forward(x, params, *, batch_tile=128):
    """x: [B, in_features] f32.  params: list of 6 (W, b) pairs, W stored [in, out].

    Returns f32 [B, out_features], matching the PyTorch FC5 forward (eval mode).
    """
    assert batch_tile % SUBLANE_BF16 == 0, "batch_tile must be a multiple of 16 (bf16 sublanes)"
    B, in_features = x.shape
    out_features = params[-1][0].shape[1]

    B_pad = _round_up(B, batch_tile)
    in_pad = _round_up(in_features, LANE)

    # Pad + cast the input (bf16 halves HBM->VMEM DMA bytes).
    x_p = jnp.zeros((B_pad, in_pad), jnp.bfloat16).at[:B, :in_features].set(
        x.astype(jnp.bfloat16))

    # Pad + cast the parameters.  Weights -> bf16 (MXU operands), biases -> f32 (VPU add).
    flat_args = []
    in_specs = [pl.BlockSpec((batch_tile, in_pad), lambda i: (i, 0))]
    cur_in = in_pad
    flops = 0
    bytes_accessed = x_p.size * 2
    weight_vmem_bytes = 0
    for (w, b) in params:
        k, n = w.shape
        assert k <= cur_in
        n_pad = _round_up(n, LANE)
        w_p = jnp.zeros((cur_in, n_pad), jnp.bfloat16).at[:k, :n].set(
            w.astype(jnp.bfloat16))
        b_p = jnp.zeros((1, n_pad), jnp.float32).at[0, :n].set(b)
        flat_args.extend([w_p, b_p])
        in_specs.append(pl.BlockSpec((cur_in, n_pad), lambda i: (0, 0)))
        in_specs.append(pl.BlockSpec((1, n_pad), lambda i: (0, 0)))
        flops += 2 * B_pad * cur_in * n_pad
        bytes_accessed += w_p.size * 2 + b_p.size * 4
        weight_vmem_bytes += w_p.size * 2 + b_p.size * 4
        cur_in = n_pad
    out_pad = cur_in
    bytes_accessed += B_pad * out_pad * 4

    # Explicit VMEM budget: weights + biases (x2 for default double-buffering) plus
    # double-buffered x tiles and output tiles.  Only raise the scoped limit when the
    # default would not fit (matters when scaling hidden dims, especially on v7x's
    # 64 MiB VMEM); cap well under every generation's physical capacity.
    vmem_needed = (2 * weight_vmem_bytes
                   + 2 * batch_tile * in_pad * 2
                   + 2 * batch_tile * out_pad * 4
                   + 2 * batch_tile * 1024 * 4)       # headroom for live activations
    vmem_limit = None
    if vmem_needed > 14 * 1024 * 1024:
        vmem_limit = min(int(vmem_needed * 3 // 2), 48 * 1024 * 1024)

    grid = (B_pad // batch_tile,)
    out_spec = pl.BlockSpec((batch_tile, out_pad), lambda i: (i, 0))

    out_padded = pl.pallas_call(
        fc5_kernel,
        out_shape=jax.ShapeDtypeStruct((B_pad, out_pad), jnp.float32),
        grid_spec=pl.GridSpec(
            grid=grid,
            in_specs=in_specs,
            out_specs=out_spec,
        ),
        compiler_params=pltpu.CompilerParams(
            dimension_semantics=("parallel",),
            vmem_limit_bytes=vmem_limit,
        ),
        cost_estimate=pl.CostEstimate(
            flops=int(flops), transcendentals=0, bytes_accessed=int(bytes_accessed)),
    )(x_p, *flat_args)

    return out_padded[:B, :out_features]


def init_fc5_params(key, in_features, out_features, hidden_dims):
    """Deterministic init matching PyTorch nn.Linear's U(-1/sqrt(fan_in), +)."""
    dims = [in_features] + list(hidden_dims) + [out_features]
    params = []
    for i in range(len(dims) - 1):
        fan_in, fan_out = dims[i], dims[i + 1]
        key, kw, kb = jax.random.split(key, 3)
        bound = 1.0 / jnp.sqrt(fan_in)
        # Stored as [in, out] (transpose of PyTorch's [out, in] weight layout).
        w = jax.random.uniform(kw, (fan_in, fan_out), jnp.float32, -bound, bound)
        b = jax.random.uniform(kb, (fan_out,), jnp.float32, -bound, bound)
        params.append((w, b))
    return params


def fc5_reference_f32(x, params):
    """Plain-JAX f32 reference (exact PyTorch math, eval mode)."""
    h = x
    for (w, b) in params[:-1]:
        h = jnp.maximum(h @ w + b, 0.0)
    w, b = params[-1]
    return h @ w + b


def fc5_reference_bf16(x, params):
    """Plain-JAX reference using the same bf16-operand / f32-accumulate math as the kernel."""
    h = x
    for (w, b) in params[:-1]:
        y = jnp.dot(h.astype(jnp.bfloat16), w.astype(jnp.bfloat16),
                    preferred_element_type=jnp.float32) + b
        h = jnp.maximum(y, 0.0)
    w, b = params[-1]
    return jnp.dot(h.astype(jnp.bfloat16), w.astype(jnp.bfloat16),
                   preferred_element_type=jnp.float32) + b


if __name__ == "__main__":
    key = jax.random.PRNGKey(0)

    # Small shapes consistent with the module.
    batch = 8
    in_features = 32
    hidden_dims = (32, 64, 32, 64, 32)   # hidden_dim_1 .. hidden_dim_5
    out_features = 16

    kx, kp = jax.random.split(key)
    x = jax.random.normal(kx, (batch, in_features), jnp.float32)
    params = init_fc5_params(kp, in_features, out_features, hidden_dims)

    out = fc5_forward(x, params)
    out = jax.block_until_ready(out)
    assert out.shape == (batch, out_features)

    # Tight check against a reference using the same bf16-operand math.
    ref_bf16 = fc5_reference_bf16(x, params)
    assert jnp.allclose(out, ref_bf16, atol=1e-3, rtol=1e-3), "mismatch vs bf16 reference"

    # Looser sanity check against the exact f32 PyTorch-equivalent math.
    ref_f32 = fc5_reference_f32(x, params)
    assert jnp.allclose(out, ref_f32, atol=5e-2, rtol=5e-2), "mismatch vs f32 reference"

    print("KERNEL_OK")
</pallas_src>

<mosaic_0001>
module attributes {stable_mosaic.version = 11 : i64} {
  func.func @fc5_kernel(%arg0: i32, %arg1: memref<128x128xbf16, #tpu.memory_space<vmem>>, %arg2: memref<128x128xbf16, #tpu.memory_space<vmem>>, %arg3: memref<1x128xf32, #tpu.memory_space<vmem>>, %arg4: memref<128x128xbf16, #tpu.memory_space<vmem>>, %arg5: memref<1x128xf32, #tpu.memory_space<vmem>>, %arg6: memref<128x128xbf16, #tpu.memory_space<vmem>>, %arg7: memref<1x128xf32, #tpu.memory_space<vmem>>, %arg8: memref<128x128xbf16, #tpu.memory_space<vmem>>, %arg9: memref<1x128xf32, #tpu.memory_space<vmem>>, %arg10: memref<128x128xbf16, #tpu.memory_space<vmem>>, %arg11: memref<1x128xf32, #tpu.memory_space<vmem>>, %arg12: memref<128x128xbf16, #tpu.memory_space<vmem>>, %arg13: memref<1x128xf32, #tpu.memory_space<vmem>>, %arg14: memref<128x128xf32, #tpu.memory_space<vmem>>) attributes {dimension_semantics = [#tpu.dimension_semantics<parallel>], iteration_bounds = array<i64: 1>, scalar_prefetch = 0 : i64, scratch_operands = 0 : i64, tpu.core_type = #tpu.core_type<tc>, window_params = [{transform_indices = @transform_0, window_bounds = array<i64: 128, 128>}, {pipeline_mode = #tpu.pipeline_mode<synchronous>, transform_indices = @transform_1, window_bounds = array<i64: 128, 128>}, {pipeline_mode = #tpu.pipeline_mode<synchronous>, transform_indices = @transform_2, window_bounds = array<i64: 1, 128>}, {pipeline_mode = #tpu.pipeline_mode<synchronous>, transform_indices = @transform_3, window_bounds = array<i64: 128, 128>}, {pipeline_mode = #tpu.pipeline_mode<synchronous>, transform_indices = @transform_4, window_bounds = array<i64: 1, 128>}, {pipeline_mode = #tpu.pipeline_mode<synchronous>, transform_indices = @transform_5, window_bounds = array<i64: 128, 128>}, {pipeline_mode = #tpu.pipeline_mode<synchronous>, transform_indices = @transform_6, window_bounds = array<i64: 1, 128>}, {pipeline_mode = #tpu.pipeline_mode<synchronous>, transform_indices = @transform_7, window_bounds = array<i64: 128, 128>}, {pipeline_mode = #tpu.pipeline_mode<synchronous>, transform_indices = @transform_8, window_bounds = array<i64: 1, 128>}, {pipeline_mode = #tpu.pipeline_mode<synchronous>, transform_indices = @transform_9, window_bounds = array<i64: 128, 128>}, {pipeline_mode = #tpu.pipeline_mode<synchronous>, transform_indices = @transform_10, window_bounds = array<i64: 1, 128>}, {pipeline_mode = #tpu.pipeline_mode<synchronous>, transform_indices = @transform_11, window_bounds = array<i64: 128, 128>}, {pipeline_mode = #tpu.pipeline_mode<synchronous>, transform_indices = @transform_12, window_bounds = array<i64: 1, 128>}, {transform_indices = @transform_13, window_bounds = array<i64: 128, 128>}]} {
    %c0 = arith.constant 0 : index
    %c0_0 = arith.constant 0 : index
    %0 = vector.load %arg1[%c0, %c0_0] : memref<128x128xbf16, #tpu.memory_space<vmem>>, vector<128x128xbf16>
    %c0_1 = arith.constant 0 : index
    %c0_2 = arith.constant 0 : index
    %1 = vector.load %arg2[%c0_1, %c0_2] : memref<128x128xbf16, #tpu.memory_space<vmem>>, vector<128x128xbf16>
    %cst = arith.constant dense<0.000000e+00> : vector<128x128xf32>
    %2 = tpu.matmul %0, %1, %cst {dimension_numbers = #tpu.dot_dimension_numbers<[1], [0], [0], [1], [0, 0, 1, 1], [], []>} : vector<128x128xbf16>, vector<128x128xbf16>, vector<128x128xf32> -> vector<128x128xf32>
    %c0_3 = arith.constant 0 : index
    %c0_4 = arith.constant 0 : index
    %3 = vector.load %arg3[%c0_3, %c0_4] : memref<1x128xf32, #tpu.memory_space<vmem>>, vector<1x128xf32>
    %4 = vector.broadcast %3 : vector<1x128xf32> to vector<128x128xf32>
    %5 = arith.addf %2, %4 : vector<128x128xf32>
    %cst_5 = arith.constant 0.000000e+00 : f32
    %6 = vector.broadcast %cst_5 : f32 to vector<128x128xf32>
    %7 = arith.maximumf %5, %6 : vector<128x128xf32>
    %8 = arith.truncf %7 : vector<128x128xf32> to vector<128x128xbf16>
    %c0_6 = arith.constant 0 : index
    %c0_7 = arith.constant 0 : index
    %9 = vector.load %arg4[%c0_6, %c0_7] : memref<128x128xbf16, #tpu.memory_space<vmem>>, vector<128x128xbf16>
    %cst_8 = arith.constant dense<0.000000e+00> : vector<128x128xf32>
    %10 = tpu.matmul %8, %9, %cst_8 {dimension_numbers = #tpu.dot_dimension_numbers<[1], [0], [0], [1], [0, 0, 1, 1], [], []>} : vector<128x128xbf16>, vector<128x128xbf16>, vector<128x128xf32> -> vector<128x128xf32>
    %c0_9 = arith.constant 0 : index
    %c0_10 = arith.constant 0 : index
    %11 = vector.load %arg5[%c0_9, %c0_10] : memref<1x128xf32, #tpu.memory_space<vmem>>, vector<1x128xf32>
    %12 = vector.broadcast %11 : vector<1x128xf32> to vector<128x128xf32>
    %13 = arith.addf %10, %12 : vector<128x128xf32>
    %cst_11 = arith.constant 0.000000e+00 : f32
    %14 = vector.broadcast %cst_11 : f32 to vector<128x128xf32>
    %15 = arith.maximumf %13, %14 : vector<128x128xf32>
    %16 = arith.truncf %15 : vector<128x128xf32> to vector<128x128xbf16>
    %c0_12 = arith.constant 0 : index
    %c0_13 = arith.constant 0 : index
    %17 = vector.load %arg6[%c0_12, %c0_13] : memref<128x128xbf16, #tpu.memory_space<vmem>>, vector<128x128xbf16>
    %cst_14 = arith.constant dense<0.000000e+00> : vector<128x128xf32>
    %18 = tpu.matmul %16, %17, %cst_14 {dimension_numbers = #tpu.dot_dimension_numbers<[1], [0], [0], [1], [0, 0, 1, 1], [], []>} : vector<128x128xbf16>, vector<128x128xbf16>, vector<128x128xf32> -> vector<128x128xf32>
    %c0_15 = arith.constant 0 : index
    %c0_16 = arith.constant 0 : index
    %19 = vector.load %arg7[%c0_15, %c0_16] : memref<1x128xf32, #tpu.memory_space<vmem>>, vector<1x128xf32>
    %20 = vector.broadcast %19 : vector<1x128xf32> to vector<128x128xf32>
    %21 = arith.addf %18, %20 : vector<128x128xf32>
    %cst_17 = arith.constant 0.000000e+00 : f32
    %22 = vector.broadcast %cst_17 : f32 to vector<128x128xf32>
    %23 = arith.maximumf %21, %22 : vector<128x128xf32>
    %24 = arith.truncf %23 : vector<128x128xf32> to vector<128x128xbf16>
    %c0_18 = arith.constant 0 : index
    %c0_19 = arith.constant 0 : index
    %25 = vector.load %arg8[%c0_18, %c0_19] : memref<128x128xbf16, #tpu.memory_space<vmem>>, vector<128x128xbf16>
    %cst_20 = arith.constant dense<0.000000e+00> : vector<128x128xf32>
    %26 = tpu.matmul %24, %25, %cst_20 {dimension_numbers = #tpu.dot_dimension_numbers<[1], [0], [0], [1], [0, 0, 1, 1], [], []>} : vector<128x128xbf16>, vector<128x128xbf16>, vector<128x128xf32> -> vector<128x128xf32>
    %c0_21 = arith.constant 0 : index
    %c0_22 = arith.constant 0 : index
    %27 = vector.load %arg9[%c0_21, %c0_22] : memref<1x128xf32, #tpu.memory_space<vmem>>, vector<1x128xf32>
    %28 = vector.broadcast %27 : vector<1x128xf32> to vector<128x128xf32>
    %29 = arith.addf %26, %28 : vector<128x128xf32>
    %cst_23 = arith.constant 0.000000e+00 : f32
    %30 = vector.broadcast %cst_23 : f32 to vector<128x128xf32>
    %31 = arith.maximumf %29, %30 : vector<128x128xf32>
    %32 = arith.truncf %31 : vector<128x128xf32> to vector<128x128xbf16>
    %c0_24 = arith.constant 0 : index
    %c0_25 = arith.constant 0 : index
    %33 = vector.load %arg10[%c0_24, %c0_25] : memref<128x128xbf16, #tpu.memory_space<vmem>>, vector<128x128xbf16>
    %cst_26 = arith.constant dense<0.000000e+00> : vector<128x128xf32>
    %34 = tpu.matmul %32, %33, %cst_26 {dimension_numbers = #tpu.dot_dimension_numbers<[1], [0], [0], [1], [0, 0, 1, 1], [], []>} : vector<128x128xbf16>, vector<128x128xbf16>, vector<128x128xf32> -> vector<128x128xf32>
    %c0_27 = arith.constant 0 : index
    %c0_28 = arith.constant 0 : index
    %35 = vector.load %arg11[%c0_27, %c0_28] : memref<1x128xf32, #tpu.memory_space<vmem>>, vector<1x128xf32>
    %36 = vector.broadcast %35 : vector<1x128xf32> to vector<128x128xf32>
    %37 = arith.addf %34, %36 : vector<128x128xf32>
    %cst_29 = arith.constant 0.000000e+00 : f32
    %38 = vector.broadcast %cst_29 : f32 to vector<128x128xf32>
    %39 = arith.maximumf %37, %38 : vector<128x128xf32>
    %40 = arith.truncf %39 : vector<128x128xf32> to vector<128x128xbf16>
    %c0_30 = arith.constant 0 : index
    %c0_31 = arith.constant 0 : index
    %41 = vector.load %arg12[%c0_30, %c0_31] : memref<128x128xbf16, #tpu.memory_space<vmem>>, vector<128x128xbf16>
    %cst_32 = arith.constant dense<0.000000e+00> : vector<128x128xf32>
    %42 = tpu.matmul %40, %41, %cst_32 {dimension_numbers = #tpu.dot_dimension_numbers<[1], [0], [0], [1], [0, 0, 1, 1], [], []>} : vector<128x128xbf16>, vector<128x128xbf16>, vector<128x128xf32> -> vector<128x128xf32>
    %c0_33 = arith.constant 0 : index
    %c0_34 = arith.constant 0 : index
    %43 = vector.load %arg13[%c0_33, %c0_34] : memref<1x128xf32, #tpu.memory_space<vmem>>, vector<1x128xf32>
    %44 = vector.broadcast %43 : vector<1x128xf32> to vector<128x128xf32>
    %45 = arith.addf %42, %44 : vector<128x128xf32>
    %c0_35 = arith.constant 0 : index
    %c0_36 = arith.constant 0 : index
    %46 = vector.load %arg14[%c0_35, %c0_36] : memref<128x128xf32, #tpu.memory_space<vmem>>, vector<128x128xf32>
    tpu.vector_store %arg14[%c0_35, %c0_36], %45 {strides = array<i32>} : memref<128x128xf32, #tpu.memory_space<vmem>>, vector<128x128xf32>,
    return
  }
  func.func @transform_0(%arg0: i32) -> (i32, i32) {
    %c0_i32 = arith.constant 0 : i32
    %c0_i32_0 = arith.constant 0 : i32
    return %arg0, %c0_i32 : i32, i32
  }
  func.func @transform_1(%arg0: i32) -> (i32, i32) {
    %c0_i32 = arith.constant 0 : i32
    %c0_i32_0 = arith.constant 0 : i32
    %c0_i32_1 = arith.constant 0 : i32
    return %c0_i32, %c0_i32_0 : i32, i32
  }
  func.func @transform_2(%arg0: i32) -> (i32, i32) {
    %c0_i32 = arith.constant 0 : i32
    %c0_i32_0 = arith.constant 0 : i32
    %c0_i32_1 = arith.constant 0 : i32
    return %c0_i32, %c0_i32_0 : i32, i32
  }
  func.func @transform_3(%arg0: i32) -> (i32, i32) {
    %c0_i32 = arith.constant 0 : i32
    %c0_i32_0 = arith.constant 0 : i32
    %c0_i32_1 = arith.constant 0 : i32
    return %c0_i32, %c0_i32_0 : i32, i32
  }
  func.func @transform_4(%arg0: i32) -> (i32, i32) {
    %c0_i32 = arith.constant 0 : i32
    %c0_i32_0 = arith.constant 0 : i32
    %c0_i32_1 = arith.constant 0 : i32
    return %c0_i32, %c0_i32_0 : i32, i32
  }
  func.func @transform_5(%arg0: i32) -> (i32, i32) {
    %c0_i32 = arith.constant 0 : i32
    %c0_i32_0 = arith.constant 0 : i32
    %c0_i32_1 = arith.constant 0 : i32
    return %c0_i32, %c0_i32_0 : i32, i32
  }
  func.func @transform_6(%arg0: i32) -> (i32, i32) {
    %c0_i32 = arith.constant 0 : i32
    %c0_i32_0 = arith.constant 0 : i32
    %c0_i32_1 = arith.constant 0 : i32
    return %c0_i32, %c0_i32_0 : i32, i32
  }
  func.func @transform_7(%arg0: i32) -> (i32, i32) {
    %c0_i32 = arith.constant 0 : i32
    %c0_i32_0 = arith.constant 0 : i32
    %c0_i32_1 = arith.constant 0 : i32
    return %c0_i32, %c0_i32_0 : i32, i32
  }
  func.func @transform_8(%arg0: i32) -> (i32, i32) {
    %c0_i32 = arith.constant 0 : i32
    %c0_i32_0 = arith.constant 0 : i32
    %c0_i32_1 = arith.constant 0 : i32
    return %c0_i32, %c0_i32_0 : i32, i32
  }
  func.func @transform_9(%arg0: i32) -> (i32, i32) {
    %c0_i32 = arith.constant 0 : i32
    %c0_i32_0 = arith.constant 0 : i32
    %c0_i32_1 = arith.constant 0 : i32
    return %c0_i32, %c0_i32_0 : i32, i32
  }
  func.func @transform_10(%arg0: i32) -> (i32, i32) {
    %c0_i32 = arith.constant 0 : i32
    %c0_i32_0 = arith.constant 0 : i32
    %c0_i32_1 = arith.constant 0 : i32
    return %c0_i32, %c0_i32_0 : i32, i32
  }
  func.func @transform_11(%arg0: i32) -> (i32, i32) {
    %c0_i32 = arith.constant 0 : i32
    %c0_i32_0 = arith.constant 0 : i32
    %c0_i32_1 = arith.constant 0 : i32
    return %c0_i32, %c0_i32_0 : i32, i32
  }
  func.func @transform_12(%arg0: i32) -> (i32, i32) {
    %c0_i32 = arith.constant 0 : i32
    %c0_i32_0 = arith.constant 0 : i32
    %c0_i32_1 = arith.constant 0 : i32
    return %c0_i32, %c0_i32_0 : i32, i32
  }
  func.func @transform_13(%arg0: i32) -> (i32, i32) {
    %c0_i32 = arith.constant 0 : i32
    %c0_i32_0 = arith.constant 0 : i32
    return %arg0, %c0_i32 : i32, i32
  }
}

</mosaic_0001>

<llo_original>
// kernel: tpu_custom_call.1
$region0: #{tpu_custom_call.1}
  #allocation0 [shape = 'u32[]', space=smem, size = 0x4, offset = 0x4, fixed_abs, tag = 'smem constant byte address 0x4 - core index']
  #allocation1 [shape = 'u32[144,128]{1,0:T(1,128)}', space=vmem, size = 0x12000, scoped, tag = 'internal scratch']
  %s0 = inlined_call_operand.hbm [shape: bf16[128,128], index: 0, kind: input, shape index: {}]
  %s1 = inlined_call_operand.hbm [shape: bf16[128,128], index: 1, kind: input, shape index: {}]
  %s2 = inlined_call_operand.vmem [shape: f32[1,128], index: 2, kind: input, shape index: {}]
  %s3 = inlined_call_operand.hbm [shape: bf16[128,128], index: 3, kind: input, shape index: {}]
  %s4 = inlined_call_operand.vmem [shape: f32[1,128], index: 4, kind: input, shape index: {}]
  %s5 = inlined_call_operand.hbm [shape: bf16[128,128], index: 5, kind: input, shape index: {}]
  %s6 = inlined_call_operand.vmem [shape: f32[1,128], index: 6, kind: input, shape index: {}]
  %s7 = inlined_call_operand.hbm [shape: bf16[128,128], index: 7, kind: input, shape index: {}]
  %s8 = inlined_call_operand.vmem [shape: f32[1,128], index: 8, kind: input, shape index: {}]
  %s9 = inlined_call_operand.hbm [shape: bf16[128,128], index: 9, kind: input, shape index: {}]
  %s10 = inlined_call_operand.vmem [shape: f32[1,128], index: 10, kind: input, shape index: {}]
  %s11 = inlined_call_operand.hbm [shape: bf16[128,128], index: 11, kind: input, shape index: {}]
  %s12 = inlined_call_operand.vmem [shape: f32[1,128], index: 12, kind: input, shape index: {}]
  %s13 = inlined_call_operand.hbm [shape: f32[128,128], index: 13, kind: output, shape index: {}]
  %s14 = sld [smem:[#allocation0]]
  $region90: #{tpu_custom_call.1} parent=0
    _
  %s16 = ssub.s32 1, %s14
  %s17 = scalar_select 0, %s16, %s14
  $region1: #{tpu_custom_call.1} parent=0
    #allocation2 [shape = 'u8[32768]{0}', space=vmem, size = 0x8000, scoped, tag = 'input window, operand 0, single buffered']
    #allocation3 [shape = 's32[1]{0}', space=sflag, size = 0x4, scoped, tag = 'scoped memory for tpu_custom_call.1']
    #allocation4 [shape = 's32[1]{0}', space=sflag, size = 0x4, scoped, tag = 'scoped memory for tpu_custom_call.1']
    #allocation5 [shape = 'u8[32768]{0}', space=vmem, size = 0x8000, scoped, tag = 'input window, operand 1, single buffered']
    #allocation6 [shape = 's32[1]{0}', space=sflag, size = 0x4, scoped, tag = 'scoped memory for tpu_custom_call.1']
    #allocation7 [shape = 'u8[32768]{0}', space=vmem, size = 0x8000, scoped, tag = 'input window, operand 3, single buffered']
    #allocation8 [shape = 'u8[32768]{0}', space=vmem, size = 0x8000, scoped, tag = 'input window, operand 5, single buffered']
    #allocation9 [shape = 's32[1]{0}', space=sflag, size = 0x4, scoped, tag = 'scoped memory for tpu_custom_call.1']
    #allocation10 [shape = 'u8[32768]{0}', space=vmem, size = 0x8000, scoped, tag = 'input window, operand 7, single buffered']
    #allocation11 [shape = 'u8[32768]{0}', space=vmem, size = 0x8000, scoped, tag = 'input window, operand 9, single buffered']
    #allocation12 [shape = 's32[1]{0}', space=sflag, size = 0x4, scoped, tag = 'scoped memory for tpu_custom_call.1']
    #allocation13 [shape = 'u8[32768]{0}', space=vmem, size = 0x8000, scoped, tag = 'input window, operand 11, single buffered']
    #allocation14 [shape = 'u8[65536]{0}', space=vmem, size = 0x10000, scoped, tag = 'output window, operand 0, single buffered']
    %18 = vsyncpa [#allocation3], 0
    %19 = vsyncpa [#allocation6], 0
    %20 = vsyncpa [#allocation9], 0
    %21 = vsyncpa [#allocation12], 0
    %22 = vsyncpa [#allocation4], 0
    // Predicated region
    $region2: #{tpu_custom_call.1} parent=1 // pred_check
      _
    $region3: #{tpu_custom_call.1} parent=1 // pred_check_branch
      %24 = sbr.rel (0) target = $region5
    $region4: #{tpu_custom_call.1} parent=1 // pred_region
      %s26 = ssub.s32 1024, 1024
      %27 = vsyncadd [#allocation3], %s26
      %s28 = sshll.u32 [#allocation2], 4
      %s29 = int_to_ptr.vmem [resolvable:$true] %s28
      %34 = dma.hbm_to_vmem [thread:$0]  %s0, 1024, %s29, [#allocation3], 64, 64, 4
    $region5: #{tpu_custom_call.1} parent=1 // pred_fallthru
      _
    // Predicated region
    $region6: #{tpu_custom_call.1} parent=1 // pred_check
      _
    $region7: #{tpu_custom_call.1} parent=1 // pred_check_branch
      %36 = sbr.rel (0) target = $region9
    $region8: #{tpu_custom_call.1} parent=1 // pred_region
      %s38 = ssub.s32 1024, 1024
      %39 = vsyncadd [#allocation6], %s38
      %s40 = sshll.u32 [#allocation5], 4
      %s41 = int_to_ptr.vmem [resolvable:$true] %s40
      %46 = dma.hbm_to_vmem [thread:$0]  %s1, 1024, %s41, [#allocation6], 64, 64, 4
    $region9: #{tpu_custom_call.1} parent=1 // pred_fallthru
      _
    // Predicated region
    $region10: #{tpu_custom_call.1} parent=1 // pred_check
      _
    $region11: #{tpu_custom_call.1} parent=1 // pred_check_branch
      %48 = sbr.rel (0) target = $region13
    $region12: #{tpu_custom_call.1} parent=1 // pred_region
      _
    $region13: #{tpu_custom_call.1} parent=1 // pred_fallthru
      _
    // Predicated region
    $region14: #{tpu_custom_call.1} parent=1 // pred_check
      _
    $region15: #{tpu_custom_call.1} parent=1 // pred_check_branch
      %50 = sbr.rel (0) target = $region17
    $region16: #{tpu_custom_call.1} parent=1 // pred_region
      %s52 = ssub.s32 1024, 1024
      %53 = vsyncadd [#allocation6], %s52
      %s54 = sshll.u32 [#allocation7], 4
      %s55 = int_to_ptr.vmem [resolvable:$true] %s54
      %60 = dma.hbm_to_vmem [thread:$0]  %s3, 1024, %s55, [#allocation6], 64, 64, 4
    $region17: #{tpu_custom_call.1} parent=1 // pred_fallthru
      _
    // Predicated region
    $region18: #{tpu_custom_call.1} parent=1 // pred_check
      _
    $region19: #{tpu_custom_call.1} parent=1 // pred_check_branch
      %62 = sbr.rel (0) target = $region21
    $region20: #{tpu_custom_call.1} parent=1 // pred_region
      _
    $region21: #{tpu_custom_call.1} parent=1 // pred_fallthru
      _
    // Predicated region
    $region22: #{tpu_custom_call.1} parent=1 // pred_check
      _
    $region23: #{tpu_custom_call.1} parent=1 // pred_check_branch
      %64 = sbr.rel (0) target = $region25
    $region24: #{tpu_custom_call.1} parent=1 // pred_region
      %s66 = ssub.s32 1024, 1024
      %67 = vsyncadd [#allocation9], %s66
      %s68 = sshll.u32 [#allocation8], 4
      %s69 = int_to_ptr.vmem [resolvable:$true] %s68
      %74 = dma.hbm_to_vmem [thread:$0]  %s5, 1024, %s69, [#allocation9], 64, 64, 4
    $region25: #{tpu_custom_call.1} parent=1 // pred_fallthru
      _
    // Predicated region
    $region26: #{tpu_custom_call.1} parent=1 // pred_check
      _
    $region27: #{tpu_custom_call.1} parent=1 // pred_check_branch
      %76 = sbr.rel (0) target = $region29
    $region28: #{tpu_custom_call.1} parent=1 // pred_region
      _
    $region29: #{tpu_custom_call.1} parent=1 // pred_fallthru
      _
    // Predicated region
    $region30: #{tpu_custom_call.1} parent=1 // pred_check
      _
    $region31: #{tpu_custom_call.1} parent=1 // pred_check_branch
      %78 = sbr.rel (0) target = $region33
    $region32: #{tpu_custom_call.1} parent=1 // pred_region
      %s80 = ssub.s32 1024, 1024
      %81 = vsyncadd [#allocation9], %s80
      %s82 = sshll.u32 [#allocation10], 4
      %s83 = int_to_ptr.vmem [resolvable:$true] %s82
      %88 = dma.hbm_to_vmem [thread:$0]  %s7, 1024, %s83, [#allocation9], 64, 64, 4
    $region33: #{tpu_custom_call.1} parent=1 // pred_fallthru
      _
    // Predicated region
    $region34: #{tpu_custom_call.1} parent=1 // pred_check
      _
    $region35: #{tpu_custom_call.1} parent=1 // pred_check_branch
      %90 = sbr.rel (0) target = $region37
    $region36: #{tpu_custom_call.1} parent=1 // pred_region
      _
    $region37: #{tpu_custom_call.1} parent=1 // pred_fallthru
      _
    // Predicated region
    $region38: #{tpu_custom_call.1} parent=1 // pred_check
      _
    $region39: #{tpu_custom_call.1} parent=1 // pred_check_branch
      %92 = sbr.rel (0) target = $region41
    $region40: #{tpu_custom_call.1} parent=1 // pred_region
      %s94 = ssub.s32 1024, 1024
      %95 = vsyncadd [#allocation12], %s94
      %s96 = sshll.u32 [#allocation11], 4
      %s97 = int_to_ptr.vmem [resolvable:$true] %s96
      %102 = dma.hbm_to_vmem [thread:$0]  %s9, 1024, %s97, [#allocation12], 64, 64, 4
    $region41: #{tpu_custom_call.1} parent=1 // pred_fallthru
      _
    // Predicated region
    $region42: #{tpu_custom_call.1} parent=1 // pred_check
      _
    $region43: #{tpu_custom_call.1} parent=1 // pred_check_branch
      %104 = sbr.rel (0) target = $region45
    $region44: #{tpu_custom_call.1} parent=1 // pred_region
      _
    $region45: #{tpu_custom_call.1} parent=1 // pred_fallthru
      _
    // Predicated region
    $region46: #{tpu_custom_call.1} parent=1 // pred_check
      _
    $region47: #{tpu_custom_call.1} parent=1 // pred_check_branch
      %106 = sbr.rel (0) target = $region49
    $region48: #{tpu_custom_call.1} parent=1 // pred_region
      %s108 = ssub.s32 1024, 1024
      %109 = vsyncadd [#allocation12], %s108
      %s110 = sshll.u32 [#allocation13], 4
      %s111 = int_to_ptr.vmem [resolvable:$true] %s110
      %116 = dma.hbm_to_vmem [thread:$0]  %s11, 1024, %s111, [#allocation12], 64, 64, 4
    $region49: #{tpu_custom_call.1} parent=1 // pred_fallthru
      _
    // Predicated region
    $region50: #{tpu_custom_call.1} parent=1 // pred_check
      _
    $region51: #{tpu_custom_call.1} parent=1 // pred_check_branch
      %118 = sbr.rel (0) target = $region53
    $region52: #{tpu_custom_call.1} parent=1 // pred_region
      _
    $region53: #{tpu_custom_call.1} parent=1 // pred_fallthru
      _
    // Predicated region
    $region54: #{tpu_custom_call.1} parent=1 // pred_check
      _
    $region55: #{tpu_custom_call.1} parent=1 // pred_check_branch
      %120 = sbr.rel (0) target = $region57
    $region56: #{tpu_custom_call.1} parent=1 // pred_region
      %121 = dma.done [#allocation3], 1024
    $region57: #{tpu_custom_call.1} parent=1 // pred_fallthru
      _
    // Predicated region
    $region58: #{tpu_custom_call.1} parent=1 // pred_check
      _
    $region59: #{tpu_custom_call.1} parent=1 // pred_check_branch
      %123 = sbr.rel (0) target = $region61
    $region60: #{tpu_custom_call.1} parent=1 // pred_region
      %124 = dma.done [#allocation6], 1024
    $region61: #{tpu_custom_call.1} parent=1 // pred_fallthru
      _
    // Predicated region
    $region62: #{tpu_custom_call.1} parent=1 // pred_check
      _
    $region63: #{tpu_custom_call.1} parent=1 // pred_check_branch
      %126 = sbr.rel (0) target = $region65
    $region64: #{tpu_custom_call.1} parent=1 // pred_region
      %127 = dma.done [#allocation6], 1024
    $region65: #{tpu_custom_call.1} parent=1 // pred_fallthru
      _
    // Predicated region
    $region66: #{tpu_custom_call.1} parent=1 // pred_check
      _
    $region67: #{tpu_custom_call.1} parent=1 // pred_check_branch
      %129 = sbr.rel (0) target = $region69
    $region68: #{tpu_custom_call.1} parent=1 // pred_region
      %130 = dma.done [#allocation9], 1024
    $region69: #{tpu_custom_call.1} parent=1 // pred_fallthru
      _
    // Predicated region
    $region70: #{tpu_custom_call.1} parent=1 // pred_check
      _
    $region71: #{tpu_custom_call.1} parent=1 // pred_check_branch
      %132 = sbr.rel (0) target = $region73
    $region72: #{tpu_custom_call.1} parent=1 // pred_region
      %133 = dma.done [#allocation9], 1024
    $region73: #{tpu_custom_call.1} parent=1 // pred_fallthru
      _
    // Predicated region
    $region74: #{tpu_custom_call.1} parent=1 // pred_check
      _
    $region75: #{tpu_custom_call.1} parent=1 // pred_check_branch
      %135 = sbr.rel (0) target = $region77
    $region76: #{tpu_custom_call.1} parent=1 // pred_region
      %136 = dma.done [#allocation12], 1024
    $region77: #{tpu_custom_call.1} parent=1 // pred_fallthru
      _
    // Predicated region
    $region78: #{tpu_custom_call.1} parent=1 // pred_check
      _
    $region79: #{tpu_custom_call.1} parent=1 // pred_check_branch
      %138 = sbr.rel (0) target = $region81
    $region80: #{tpu_custom_call.1} parent=1 // pred_region
      %139 = dma.done [#allocation12], 1024
    $region81: #{tpu_custom_call.1} parent=1 // pred_fallthru
      _
    %v141 = vld [vmem:[#allocation2] sm:$0xf]
    %v142 = vld [vmem:[#allocation2 + $0x4] sm:$0xf]
    %v143 = vld [vmem:[#allocation2 + $0x8] sm:$0xf]
    %v144 = vld [vmem:[#allocation2 + $0xc] sm:$0xf]
    %v145 = vld [vmem:[#allocation2 + $0x10] sm:$0xf]
    %v146 = vld [vmem:[#allocation2 + $0x14] sm:$0xf]
    %v147 = vld [vmem:[#allocation2 + $0x18] sm:$0xf]
    %v148 = vld [vmem:[#allocation2 + $0x1c] sm:$0xf]
    %v149 = vld [vmem:[#allocation2 + $0x20] sm:$0xf]
    %v150 = vld [vmem:[#allocation2 + $0x24] sm:$0xf]
    %v151 = vld [vmem:[#allocation2 + $0x28] sm:$0xf]
    %v152 = vld [vmem:[#allocation2 + $0x2c] sm:$0xf]
    %v153 = vld [vmem:[#allocation2 + $0x30] sm:$0xf]
    %v154 = vld [vmem:[#allocation2 + $0x34] sm:$0xf]
    %v155 = vld [vmem:[#allocation2 + $0x38] sm:$0xf]
    %v156 = vld [vmem:[#allocation2 + $0x3c] sm:$0xf]
    %v157 = vld [vmem:[#allocation5] sm:$0xf]
    %v158 = vld [vmem:[#allocation5 + $0x4] sm:$0xf]
    %v159 = vld [vmem:[#allocation5 + $0x8] sm:$0xf]
    %v160 = vld [vmem:[#allocation5 + $0xc] sm:$0xf]
    %v161 = vld [vmem:[#allocation5 + $0x10] sm:$0xf]
    %v162 = vld [vmem:[#allocation5 + $0x14] sm:$0xf]
    %v163 = vld [vmem:[#allocation5 + $0x18] sm:$0xf]
    %v164 = vld [vmem:[#allocation5 + $0x1c] sm:$0xf]
    %v165 = vld [vmem:[#allocation5 + $0x20] sm:$0xf]
    %v166 = vld [vmem:[#allocation5 + $0x24] sm:$0xf]
    %v167 = vld [vmem:[#allocation5 + $0x28] sm:$0xf]
    %v168 = vld [vmem:[#allocation5 + $0x2c] sm:$0xf]
    %v169 = vld [vmem:[#allocation5 + $0x30] sm:$0xf]
    %v170 = vld [vmem:[#allocation5 + $0x34] sm:$0xf]
    %v171 = vld [vmem:[#allocation5 + $0x38] sm:$0xf]
    %v172 = vld [vmem:[#allocation5 + $0x3c] sm:$0xf]
    %v173 = vld [vmem:[%s2] sm:$0x1]
    %v175 = vlaneseq
    %v176 = vshrl.u32 %v175, 7
    %v177 = vsub.s32 0, %v176
    %v178 = vrot.slane %v173, %v177
    %v196 = vunpack.c.l.b16 %v141
    %v197 = vunpack.c.l.b16 %v142
    %v198 = vunpack.c.l.b16 %v143
    %v199 = vunpack.c.l.b16 %v144
    %v200 = vunpack.c.l.b16 %v145
    %v201 = vunpack.c.l.b16 %v146
    %v202 = vunpack.c.l.b16 %v147
    %v203 = vunpack.c.l.b16 %v148
    %v204 = vunpack.c.l.b16 %v149
    %v205 = vunpack.c.l.b16 %v150
    %v206 = vunpack.c.l.b16 %v151
    %v207 = vunpack.c.l.b16 %v152
    %v208 = vunpack.c.l.b16 %v153
    %v209 = vunpack.c.l.b16 %v154
    %v210 = vunpack.c.l.b16 %v155
    %v211 = vunpack.c.l.b16 %v156
    %v212 = vpack.c.b16 %v197, %v196
    %v213 = vpack.c.b16 %v199, %v198
    %v214 = vpack.c.b16 %v201, %v200
    %v215 = vpack.c.b16 %v203, %v202
    %v216 = vpack.c.b16 %v205, %v204
    %v217 = vpack.c.b16 %v207, %v206
    %v218 = vpack.c.b16 %v209, %v208
    %v219 = vpack.c.b16 %v211, %v210
    %v244 = vunpack.c.l.b16 %v157
    %v245 = vunpack.c.l.b16 %v158
    %v246 = vunpack.c.l.b16 %v159
    %v247 = vunpack.c.l.b16 %v160
    %v248 = vunpack.c.l.b16 %v161
    %v249 = vunpack.c.l.b16 %v162
    %v250 = vunpack.c.l.b16 %v163
    %v251 = vunpack.c.l.b16 %v164
    %v252 = vunpack.c.l.b16 %v165
    %v253 = vunpack.c.l.b16 %v166
    %v254 = vunpack.c.l.b16 %v167
    %v255 = vunpack.c.l.b16 %v168
    %v256 = vunpack.c.l.b16 %v169
    %v257 = vunpack.c.l.b16 %v170
    %v258 = vunpack.c.l.b16 %v171
    %v259 = vunpack.c.l.b16 %v172
    %v260 = vpack.c.b16 %v245, %v244
    %v261 = vpack.c.b16 %v247, %v246
    %v262 = vpack.c.b16 %v249, %v248
    %v263 = vpack.c.b16 %v251, %v250
    %v264 = vpack.c.b16 %v253, %v252
    %v265 = vpack.c.b16 %v255, %v254
    %v266 = vpack.c.b16 %v257, %v256
    %v267 = vpack.c.b16 %v259, %v258
    %276 = vmatprep.subr.bf16.mxu0 0
    %277 = vmatpush1.bf16.msra.mxu0 %v260
    %278 = vmatprep.subr.bf16.mxu0 0
    %279 = vmatpush1.bf16.msra.mxu0 %v261
    %280 = vmatprep.subr.bf16.mxu0 0
    %281 = vmatpush1.bf16.msra.mxu0 %v262
    %282 = vmatprep.subr.bf16.mxu0 0
    %283 = vmatpush1.bf16.msra.mxu0 %v263
    %284 = vmatprep.subr.bf16.mxu0 0
    %285 = vmatpush1.bf16.msra.mxu0 %v264
    %286 = vmatprep.subr.bf16.mxu0 0
    %287 = vmatpush1.bf16.msra.mxu0 %v265
    %288 = vmatprep.subr.bf16.mxu0 0
    %289 = vmatpush1.bf16.msra.mxu0 %v266
    %290 = vmatprep.subr.bf16.mxu0 0
    %291 = vmatpush1.bf16.msra.mxu0 %v267
    %292 = vmatprep.subr.bf16.mxu0 0
    %293 = vmatpush1.bf16.msra.mxu0 0
    %294 = vmatprep.subr.bf16.mxu0 0
    %295 = vmatpush1.bf16.msra.mxu0 0
    %296 = vmatprep.subr.bf16.mxu0 0
    %297 = vmatpush1.bf16.msra.mxu0 0
    %298 = vmatprep.subr.bf16.mxu0 0
    %299 = vmatpush1.bf16.msra.mxu0 0
    %300 = vmatprep.subr.bf16.mxu0 0
    %301 = vmatpush1.bf16.msra.mxu0 0
    %302 = vmatprep.subr.bf16.mxu0 0
    %303 = vmatpush1.bf16.msra.mxu0 0
    %304 = vmatprep.subr.bf16.mxu0 0
    %305 = vmatpush1.bf16.msra.mxu0 0
    %306 = vmatprep.subr.bf16.mxu0 0
    %307 = vmatpush1.bf16.msra.mxu0 0
    %308 = vmatprep.mubr.bf16.mxu0 0
    %309 = vmatmul.mubr.bf16.gmra.mrb[0].mxu0 %v212
    %v310 = vpop.f32.mrb[0].mxu0
    %v311 = vadd.f32 %v178, %v310
    %v312 = vpop.f32.mrb[0].mxu0
    %v313 = vpop.f32.mrb[0].mxu0
    %v314 = vadd.f32 %v178, %v313
    %v315 = vpop.f32.mrb[0].mxu0
    %316 = vmatprep.mubr.bf16.mxu0 0
    %317 = vmatmul.mubr.bf16.gmra.mrb[0].mxu0 %v213
    %v318 = vpop.f32.mrb[0].mxu0
    %v319 = vadd.f32 %v178, %v318
    %v320 = vpop.f32.mrb[0].mxu0
    %v321 = vpop.f32.mrb[0].mxu0
    %v322 = vadd.f32 %v178, %v321
    %v323 = vpop.f32.mrb[0].mxu0
    %324 = vmatprep.mubr.bf16.mxu0 0
    %325 = vmatmul.mubr.bf16.gmra.mrb[0].mxu0 %v214
    %v326 = vpop.f32.mrb[0].mxu0
    %v327 = vadd.f32 %v178, %v326
    %v328 = vpop.f32.mrb[0].mxu0
    %v329 = vpop.f32.mrb[0].mxu0
    %v330 = vadd.f32 %v178, %v329
    %v331 = vpop.f32.mrb[0].mxu0
    %332 = vmatprep.mubr.bf16.mxu0 0
    %333 = vmatmul.mubr.bf16.gmra.mrb[0].mxu0 %v215
    %v334 = vpop.f32.mrb[0].mxu0
    %v335 = vadd.f32 %v178, %v334
    %v336 = vpop.f32.mrb[0].mxu0
    %v337 = vpop.f32.mrb[0].mxu0
    %v338 = vadd.f32 %v178, %v337
    %v339 = vpop.f32.mrb[0].mxu0
    %340 = vmatprep.mubr.bf16.mxu0 0
    %341 = vmatmul.mubr.bf16.gmra.mrb[0].mxu0 %v216
    %v342 = vpop.f32.mrb[0].mxu0
    %v343 = vadd.f32 %v178, %v342
    %v344 = vpop.f32.mrb[0].mxu0
    %v345 = vpop.f32.mrb[0].mxu0
    %v346 = vadd.f32 %v178, %v345
    %v347 = vpop.f32.mrb[0].mxu0
    %348 = vmatprep.mubr.bf16.mxu0 0
    %349 = vmatmul.mubr.bf16.gmra.mrb[0].mxu0 %v217
    %v350 = vpop.f32.mrb[0].mxu0
    %v351 = vadd.f32 %v178, %v350
    %v352 = vpop.f32.mrb[0].mxu0
    %v353 = vpop.f32.mrb[0].mxu0
    %v354 = vadd.f32 %v178, %v353
    %v355 = vpop.f32.mrb[0].mxu0
    %356 = vmatprep.mubr.bf16.mxu0 0
    %357 = vmatmul.mubr.bf16.gmra.mrb[0].mxu0 %v218
    %v358 = vpop.f32.mrb[0].mxu0
    %v359 = vadd.f32 %v178, %v358
    %v360 = vpop.f32.mrb[0].mxu0
    %v361 = vpop.f32.mrb[0].mxu0
    %v362 = vadd.f32 %v178, %v361
    %v363 = vpop.f32.mrb[0].mxu0
    %364 = vmatprep.mubr.bf16.mxu0 0
    %365 = vmatmul.mubr.bf16.gmra.mrb[0].mxu0 %v219
    %v366 = vpop.f32.mrb[0].mxu0
    %v367 = vadd.f32 %v178, %v366
    %v368 = vpop.f32.mrb[0].mxu0
    %v369 = vpop.f32.mrb[0].mxu0
    %v370 = vadd.f32 %v178, %v369
    %v371 = vpop.f32.mrb[0].mxu0
    %372 = vdwg.mxu0
    %v373 = vmax.f32 %v311, 0.0
    %v374 = vmax.f32 %v314, 0.0
    %v375 = vmax.f32 %v319, 0.0
    %v376 = vmax.f32 %v322, 0.0
    %v377 = vmax.f32 %v327, 0.0
    %v378 = vmax.f32 %v330, 0.0
    %v379 = vmax.f32 %v335, 0.0
    %v380 = vmax.f32 %v338, 0.0
    %v381 = vmax.f32 %v343, 0.0
    %v382 = vmax.f32 %v346, 0.0
    %v383 = vmax.f32 %v351, 0.0
    %v384 = vmax.f32 %v354, 0.0
    %v385 = vmax.f32 %v359, 0.0
    %v386 = vmax.f32 %v362, 0.0
    %v387 = vmax.f32 %v367, 0.0
    %v388 = vmax.f32 %v370, 0.0
    %v389 = vpack.c.bf16 %v374, %v373
    %v390 = vpack.c.bf16 %v376, %v375
    %v391 = vpack.c.bf16 %v378, %v377
    %v392 = vpack.c.bf16 %v380, %v379
    %v393 = vpack.c.bf16 %v382, %v381
    %v394 = vpack.c.bf16 %v384, %v383
    %v395 = vpack.c.bf16 %v386, %v385
    %v396 = vpack.c.bf16 %v388, %v387
    %v397 = vld [vmem:[#allocation7] sm:$0xf]
    %v398 = vld [vmem:[#allocation7 + $0x4] sm:$0xf]
    %v399 = vld [vmem:[#allocation7 + $0x8] sm:$0xf]
    %v400 = vld [vmem:[#allocation7 + $0xc] sm:$0xf]
    %v401 = vld [vmem:[#allocation7 + $0x10] sm:$0xf]
    %v402 = vld [vmem:[#allocation7 + $0x14] sm:$0xf]
    %v403 = vld [vmem:[#allocation7 + $0x18] sm:$0xf]
    %v404 = vld [vmem:[#allocation7 + $0x1c] sm:$0xf]
    %v405 = vld [vmem:[#allocation7 + $0x20] sm:$0xf]
    %v406 = vld [vmem:[#allocation7 + $0x24] sm:$0xf]
    %v407 = vld [vmem:[#allocation7 + $0x28] sm:$0xf]
    %v408 = vld [vmem:[#allocation7 + $0x2c] sm:$0xf]
    %v409 = vld [vmem:[#allocation7 + $0x30] sm:$0xf]
    %v410 = vld [vmem:[#allocation7 + $0x34] sm:$0xf]
    %v411 = vld [vmem:[#allocation7 + $0x38] sm:$0xf]
    %v412 = vld [vmem:[#allocation7 + $0x3c] sm:$0xf]
    %v413 = vld [vmem:[%s4] sm:$0x1]
    %v415 = vlaneseq
    %v416 = vshrl.u32 %v415, 7
    %v417 = vsub.s32 0, %v416
    %v418 = vrot.slane %v413, %v417
    %v436 = vunpack.c.l.b16 %v397
    %v437 = vunpack.c.l.b16 %v398
    %v438 = vunpack.c.l.b16 %v399
    %v439 = vunpack.c.l.b16 %v400
    %v440 = vunpack.c.l.b16 %v401
    %v441 = vunpack.c.l.b16 %v402
    %v442 = vunpack.c.l.b16 %v403
    %v443 = vunpack.c.l.b16 %v404
    %v444 = vunpack.c.l.b16 %v405
    %v445 = vunpack.c.l.b16 %v406
    %v446 = vunpack.c.l.b16 %v407
    %v447 = vunpack.c.l.b16 %v408
    %v448 = vunpack.c.l.b16 %v409
    %v449 = vunpack.c.l.b16 %v410
    %v450 = vunpack.c.l.b16 %v411
    %v451 = vunpack.c.l.b16 %v412
    %v452 = vpack.c.b16 %v437, %v436
    %v453 = vpack.c.b16 %v439, %v438
    %v454 = vpack.c.b16 %v441, %v440
    %v455 = vpack.c.b16 %v443, %v442
    %v456 = vpack.c.b16 %v445, %v444
    %v457 = vpack.c.b16 %v447, %v446
    %v458 = vpack.c.b16 %v449, %v448
    %v459 = vpack.c.b16 %v451, %v450
    %468 = vmatprep.subr.bf16.mxu0 0
    %469 = vmatpush1.bf16.msra.mxu0 %v452
    %470 = vmatprep.subr.bf16.mxu0 0
    %471 = vmatpush1.bf16.msra.mxu0 %v453
    %472 = vmatprep.subr.bf16.mxu0 0
    %473 = vmatpush1.bf16.msra.mxu0 %v454
    %474 = vmatprep.subr.bf16.mxu0 0
    %475 = vmatpush1.bf16.msra.mxu0 %v455
    %476 = vmatprep.subr.bf16.mxu0 0
    %477 = vmatpush1.bf16.msra.mxu0 %v456
    %478 = vmatprep.subr.bf16.mxu0 0
    %479 = vmatpush1.bf16.msra.mxu0 %v457
    %480 = vmatprep.subr.bf16.mxu0 0
    %481 = vmatpush1.bf16.msra.mxu0 %v458
    %482 = vmatprep.subr.bf16.mxu0 0
    %483 = vmatpush1.bf16.msra.mxu0 %v459
    %484 = vmatprep.subr.bf16.mxu0 0
    %485 = vmatpush1.bf16.msra.mxu0 0
    %486 = vmatprep.subr.bf16.mxu0 0
    %487 = vmatpush1.bf16.msra.mxu0 0
    %488 = vmatprep.subr.bf16.mxu0 0
    %489 = vmatpush1.bf16.msra.mxu0 0
    %490 = vmatprep.subr.bf16.mxu0 0
    %491 = vmatpush1.bf16.msra.mxu0 0
    %492 = vmatprep.subr.bf16.mxu0 0
    %493 = vmatpush1.bf16.msra.mxu0 0
    %494 = vmatprep.subr.bf16.mxu0 0
    %495 = vmatpush1.bf16.msra.mxu0 0
    %496 = vmatprep.subr.bf16.mxu0 0
    %497 = vmatpush1.bf16.msra.mxu0 0
    %498 = vmatprep.subr.bf16.mxu0 0
    %499 = vmatpush1.bf16.msra.mxu0 0
    %500 = vmatprep.mubr.bf16.mxu0 0
    %501 = vmatmul.mubr.bf16.gmra.mrb[0].mxu0 %v389
    %v502 = vpop.f32.mrb[0].mxu0
    %v503 = vadd.f32 %v418, %v502
    %v504 = vpop.f32.mrb[0].mxu0
    %v505 = vpop.f32.mrb[0].mxu0
    %v506 = vadd.f32 %v418, %v505
    %v507 = vpop.f32.mrb[0].mxu0
    %508 = vmatprep.mubr.bf16.mxu0 0
    %509 = vmatmul.mubr.bf16.gmra.mrb[0].mxu0 %v390
    %v510 = vpop.f32.mrb[0].mxu0
    %v511 = vadd.f32 %v418, %v510
    %v512 = vpop.f32.mrb[0].mxu0
    %v513 = vpop.f32.mrb[0].mxu0
    %v514 = vadd.f32 %v418, %v513
    %v515 = vpop.f32.mrb[0].mxu0
    %516 = vmatprep.mubr.bf16.mxu0 0
    %517 = vmatmul.mubr.bf16.gmra.mrb[0].mxu0 %v391
    %v518 = vpop.f32.mrb[0].mxu0
    %v519 = vadd.f32 %v418, %v518
    %v520 = vpop.f32.mrb[0].mxu0
    %v521 = vpop.f32.mrb[0].mxu0
    %v522 = vadd.f32 %v418, %v521
    %v523 = vpop.f32.mrb[0].mxu0
    %524 = vmatprep.mubr.bf16.mxu0 0
    %525 = vmatmul.mubr.bf16.gmra.mrb[0].mxu0 %v392
    %v526 = vpop.f32.mrb[0].mxu0
    %v527 = vadd.f32 %v418, %v526
    %v528 = vpop.f32.mrb[0].mxu0
    %v529 = vpop.f32.mrb[0].mxu0
    %v530 = vadd.f32 %v418, %v529
    %v531 = vpop.f32.mrb[0].mxu0
    %532 = vmatprep.mubr.bf16.mxu0 0
    %533 = vmatmul.mubr.bf16.gmra.mrb[0].mxu0 %v393
    %v534 = vpop.f32.mrb[0].mxu0
    %v535 = vadd.f32 %v418, %v534
    %v536 = vpop.f32.mrb[0].mxu0
    %v537 = vpop.f32.mrb[0].mxu0
    %v538 = vadd.f32 %v418, %v537
    %v539 = vpop.f32.mrb[0].mxu0
    %540 = vmatprep.mubr.bf16.mxu0 0
    %541 = vmatmul.mubr.bf16.gmra.mrb[0].mxu0 %v394
    %v542 = vpop.f32.mrb[0].mxu0
    %v543 = vadd.f32 %v418, %v542
    %v544 = vpop.f32.mrb[0].mxu0
    %v545 = vpop.f32.mrb[0].mxu0
    %v546 = vadd.f32 %v418, %v545
    %v547 = vpop.f32.mrb[0].mxu0
    %548 = vmatprep.mubr.bf16.mxu0 0
    %549 = vmatmul.mubr.bf16.gmra.mrb[0].mxu0 %v395
    %v550 = vpop.f32.mrb[0].mxu0
    %v551 = vadd.f32 %v418, %v550
    %v552 = vpop.f32.mrb[0].mxu0
    %v553 = vpop.f32.mrb[0].mxu0
    %v554 = vadd.f32 %v418, %v553
    %v555 = vpop.f32.mrb[0].mxu0
    %556 = vmatprep.mubr.bf16.mxu0 0
    %557 = vmatmul.mubr.bf16.gmra.mrb[0].mxu0 %v396
    %v558 = vpop.f32.mrb[0].mxu0
    %v559 = vadd.f32 %v418, %v558
    %v560 = vpop.f32.mrb[0].mxu0
    %v561 = vpop.f32.mrb[0].mxu0
    %v562 = vadd.f32 %v418, %v561
    %v563 = vpop.f32.mrb[0].mxu0
    %564 = vdwg.mxu0
    %v565 = vmax.f32 %v503, 0.0
    %v566 = vmax.f32 %v506, 0.0
    %v567 = vmax.f32 %v511, 0.0
    %v568 = vmax.f32 %v514, 0.0
    %v569 = vmax.f32 %v519, 0.0
    %v570 = vmax.f32 %v522, 0.0
    %v571 = vmax.f32 %v527, 0.0
    %v572 = vmax.f32 %v530, 0.0
    %v573 = vmax.f32 %v535, 0.0
    %v574 = vmax.f32 %v538, 0.0
    %v575 = vmax.f32 %v543, 0.0
    %v576 = vmax.f32 %v546, 0.0
    %v577 = vmax.f32 %v551, 0.0
    %v578 = vmax.f32 %v554, 0.0
    %v579 = vmax.f32 %v559, 0.0
    %v580 = vmax.f32 %v562, 0.0
    %v581 = vpack.c.bf16 %v566, %v565
    %v582 = vpack.c.bf16 %v568, %v567
    %v583 = vpack.c.bf16 %v570, %v569
    %v584 = vpack.c.bf16 %v572, %v571
    %v585 = vpack.c.bf16 %v574, %v573
    %v586 = vpack.c.bf16 %v576, %v575
    %v587 = vpack.c.bf16 %v578, %v577
    %v588 = vpack.c.bf16 %v580, %v579
    %v589 = vld [vmem:[#allocation8] sm:$0xf]
    %v590 = vld [vmem:[#allocation8 + $0x4] sm:$0xf]
    %v591 = vld [vmem:[#allocation8 + $0x8] sm:$0xf]
    %v592 = vld [vmem:[#allocation8 + $0xc] sm:$0xf]
    %v593 = vld [vmem:[#allocation8 + $0x10] sm:$0xf]
    %v594 = vld [vmem:[#allocation8 + $0x14] sm:$0xf]
    %v595 = vld [vmem:[#allocation8 + $0x18] sm:$0xf]
    %v596 = vld [vmem:[#allocation8 + $0x1c] sm:$0xf]
    %v597 = vld [vmem:[#allocation8 + $0x20] sm:$0xf]
    %v598 = vld [vmem:[#allocation8 + $0x24] sm:$0xf]
    %v599 = vld [vmem:[#allocation8 + $0x28] sm:$0xf]
    %v600 = vld [vmem:[#allocation8 + $0x2c] sm:$0xf]
    %v601 = vld [vmem:[#allocation8 + $0x30] sm:$0xf]
    %v602 = vld [vmem:[#allocation8 + $0x34] sm:$0xf]
    %v603 = vld [vmem:[#allocation8 + $0x38] sm:$0xf]
    %v604 = vld [vmem:[#allocation8 + $0x3c] sm:$0xf]
    %v605 = vld [vmem:[%s6] sm:$0x1]
    %v607 = vlaneseq
    %v608 = vshrl.u32 %v607, 7
    %v609 = vsub.s32 0, %v608
    %v610 = vrot.slane %v605, %v609
    %v628 = vunpack.c.l.b16 %v589
    %v629 = vunpack.c.l.b16 %v590
    %v630 = vunpack.c.l.b16 %v591
    %v631 = vunpack.c.l.b16 %v592
    %v632 = vunpack.c.l.b16 %v593
    %v633 = vunpack.c.l.b16 %v594
    %v634 = vunpack.c.l.b16 %v595
    %v635 = vunpack.c.l.b16 %v596
    %v636 = vunpack.c.l.b16 %v597
    %v637 = vunpack.c.l.b16 %v598
    %v638 = vunpack.c.l.b16 %v599
    %v639 = vunpack.c.l.b16 %v600
    %v640 = vunpack.c.l.b16 %v601
    %v641 = vunpack.c.l.b16 %v602
    %v642 = vunpack.c.l.b16 %v603
    %v643 = vunpack.c.l.b16 %v604
    %v644 = vpack.c.b16 %v629, %v628
    %v645 = vpack.c.b16 %v631, %v630
    %v646 = vpack.c.b16 %v633, %v632
    %v647 = vpack.c.b16 %v635, %v634
    %v648 = vpack.c.b16 %v637, %v636
    %v649 = vpack.c.b16 %v639, %v638
    %v650 = vpack.c.b16 %v641, %v640
    %v651 = vpack.c.b16 %v643, %v642
    %660 = vmatprep.subr.bf16.mxu0 0
    %661 = vmatpush1.bf16.msra.mxu0 %v644
    %662 = vmatprep.subr.bf16.mxu0 0
    %663 = vmatpush1.bf16.msra.mxu0 %v645
    %664 = vmatprep.subr.bf16.mxu0 0
    %665 = vmatpush1.bf16.msra.mxu0 %v646
    %666 = vmatprep.subr.bf16.mxu0 0
    %667 = vmatpush1.bf16.msra.mxu0 %v647
    %668 = vmatprep.subr.bf16.mxu0 0
    %669 = vmatpush1.bf16.msra.mxu0 %v648
    %670 = vmatprep.subr.bf16.mxu0 0
    %671 = vmatpush1.bf16.msra.mxu0 %v649
    %672 = vmatprep.subr.bf16.mxu0 0
    %673 = vmatpush1.bf16.msra.mxu0 %v650
    %674 = vmatprep.subr.bf16.mxu0 0
    %675 = vmatpush1.bf16.msra.mxu0 %v651
    %676 = vmatprep.subr.bf16.mxu0 0
    %677 = vmatpush1.bf16.msra.mxu0 0
    %678 = vmatprep.subr.bf16.mxu0 0
    %679 = vmatpush1.bf16.msra.mxu0 0
    %680 = vmatprep.subr.bf16.mxu0 0
    %681 = vmatpush1.bf16.msra.mxu0 0
    %682 = vmatprep.subr.bf16.mxu0 0
    %683 = vmatpush1.bf16.msra.mxu0 0
    %684 = vmatprep.subr.bf16.mxu0 0
    %685 = vmatpush1.bf16.msra.mxu0 0
    %686 = vmatprep.subr.bf16.mxu0 0
    %687 = vmatpush1.bf16.msra.mxu0 0
    %688 = vmatprep.subr.bf16.mxu0 0
    %689 = vmatpush1.bf16.msra.mxu0 0
    %690 = vmatprep.subr.bf16.mxu0 0
    %691 = vmatpush1.bf16.msra.mxu0 0
    %692 = vmatprep.mubr.bf16.mxu0 0
    %693 = vmatmul.mubr.bf16.gmra.mrb[0].mxu0 %v581
    %v694 = vpop.f32.mrb[0].mxu0
    %v695 = vadd.f32 %v610, %v694
    %v696 = vpop.f32.mrb[0].mxu0
    %v697 = vpop.f32.mrb[0].mxu0
    %v698 = vadd.f32 %v610, %v697
    %v699 = vpop.f32.mrb[0].mxu0
    %700 = vmatprep.mubr.bf16.mxu0 0
    %701 = vmatmul.mubr.bf16.gmra.mrb[0].mxu0 %v582
    %v702 = vpop.f32.mrb[0].mxu0
    %v703 = vadd.f32 %v610, %v702
    %v704 = vpop.f32.mrb[0].mxu0
    %v705 = vpop.f32.mrb[0].mxu0
    %v706 = vadd.f32 %v610, %v705
    %v707 = vpop.f32.mrb[0].mxu0
    %708 = vmatprep.mubr.bf16.mxu0 0
    %709 = vmatmul.mubr.bf16.gmra.mrb[0].mxu0 %v583
    %v710 = vpop.f32.mrb[0].mxu0
    %v711 = vadd.f32 %v610, %v710
    %v712 = vpop.f32.mrb[0].mxu0
    %v713 = vpop.f32.mrb[0].mxu0
    %v714 = vadd.f32 %v610, %v713
    %v715 = vpop.f32.mrb[0].mxu0
    %716 = vmatprep.mubr.bf16.mxu0 0
    %717 = vmatmul.mubr.bf16.gmra.mrb[0].mxu0 %v584
    %v718 = vpop.f32.mrb[0].mxu0
    %v719 = vadd.f32 %v610, %v718
    %v720 = vpop.f32.mrb[0].mxu0
    %v721 = vpop.f32.mrb[0].mxu0
    %v722 = vadd.f32 %v610, %v721
    %v723 = vpop.f32.mrb[0].mxu0
    %724 = vmatprep.mubr.bf16.mxu0 0
    %725 = vmatmul.mubr.bf16.gmra.mrb[0].mxu0 %v585
    %v726 = vpop.f32.mrb[0].mxu0
    %v727 = vadd.f32 %v610, %v726
    %v728 = vpop.f32.mrb[0].mxu0
    %v729 = vpop.f32.mrb[0].mxu0
    %v730 = vadd.f32 %v610, %v729
    %v731 = vpop.f32.mrb[0].mxu0
    %732 = vmatprep.mubr.bf16.mxu0 0
    %733 = vmatmul.mubr.bf16.gmra.mrb[0].mxu0 %v586
    %v734 = vpop.f32.mrb[0].mxu0
    %v735 = vadd.f32 %v610, %v734
    %v736 = vpop.f32.mrb[0].mxu0
    %v737 = vpop.f32.mrb[0].mxu0
    %v738 = vadd.f32 %v610, %v737
    %v739 = vpop.f32.mrb[0].mxu0
    %740 = vmatprep.mubr.bf16.mxu0 0
    %741 = vmatmul.mubr.bf16.gmra.mrb[0].mxu0 %v587
    %v742 = vpop.f32.mrb[0].mxu0
    %v743 = vadd.f32 %v610, %v742
    %v744 = vpop.f32.mrb[0].mxu0
    %v745 = vpop.f32.mrb[0].mxu0
    %v746 = vadd.f32 %v610, %v745
    %v747 = vpop.f32.mrb[0].mxu0
    %748 = vmatprep.mubr.bf16.mxu0 0
    %749 = vmatmul.mubr.bf16.gmra.mrb[0].mxu0 %v588
    %v750 = vpop.f32.mrb[0].mxu0
    %v751 = vadd.f32 %v610, %v750
    %v752 = vpop.f32.mrb[0].mxu0
    %v753 = vpop.f32.mrb[0].mxu0
    %v754 = vadd.f32 %v610, %v753
    %v755 = vpop.f32.mrb[0].mxu0
    %756 = vdwg.mxu0
    %v757 = vmax.f32 %v695, 0.0
    %v758 = vmax.f32 %v698, 0.0
    %v759 = vmax.f32 %v703, 0.0
    %v760 = vmax.f32 %v706, 0.0
    %v761 = vmax.f32 %v711, 0.0
    %v762 = vmax.f32 %v714, 0.0
    %v763 = vmax.f32 %v719, 0.0
    %v764 = vmax.f32 %v722, 0.0
    %v765 = vmax.f32 %v727, 0.0
    %v766 = vmax.f32 %v730, 0.0
    %v767 = vmax.f32 %v735, 0.0
    %v768 = vmax.f32 %v738, 0.0
    %v769 = vmax.f32 %v743, 0.0
    %v770 = vmax.f32 %v746, 0.0
    %v771 = vmax.f32 %v751, 0.0
    %v772 = vmax.f32 %v754, 0.0
    %v773 = vpack.c.bf16 %v758, %v757
    %v774 = vpack.c.bf16 %v760, %v759
    %v775 = vpack.c.bf16 %v762, %v761
    %v776 = vpack.c.bf16 %v764, %v763
    %v777 = vpack.c.bf16 %v766, %v765
    %v778 = vpack.c.bf16 %v768, %v767
    %v779 = vpack.c.bf16 %v770, %v769
    %v780 = vpack.c.bf16 %v772, %v771
    %v781 = vld [vmem:[#allocation10] sm:$0xf]
    %v782 = vld [vmem:[#allocation10 + $0x4] sm:$0xf]
    %v783 = vld [vmem:[#allocation10 + $0x8] sm:$0xf]
    %v784 = vld [vmem:[#allocation10 + $0xc] sm:$0xf]
    %v785 = vld [vmem:[#allocation10 + $0x10] sm:$0xf]
    %v786 = vld [vmem:[#allocation10 + $0x14] sm:$0xf]
    %v787 = vld [vmem:[#allocation10 + $0x18] sm:$0xf]
    %v788 = vld [vmem:[#allocation10 + $0x1c] sm:$0xf]
    %v789 = vld [vmem:[#allocation10 + $0x20] sm:$0xf]
    %v790 = vld [vmem:[#allocation10 + $0x24] sm:$0xf]
    %v791 = vld [vmem:[#allocation10 + $0x28] sm:$0xf]
    %v792 = vld [vmem:[#allocation10 + $0x2c] sm:$0xf]
    %v793 = vld [vmem:[#allocation10 + $0x30] sm:$0xf]
    %v794 = vld [vmem:[#allocation10 + $0x34] sm:$0xf]
    %v795 = vld [vmem:[#allocation10 + $0x38] sm:$0xf]
    %v796 = vld [vmem:[#allocation10 + $0x3c] sm:$0xf]
    %v797 = vld [vmem:[%s8] sm:$0x1]
    %v799 = vlaneseq
    %v800 = vshrl.u32 %v799, 7
    %v801 = vsub.s32 0, %v800
    %v802 = vrot.slane %v797, %v801
    %v820 = vunpack.c.l.b16 %v781
    %v821 = vunpack.c.l.b16 %v782
    %v822 = vunpack.c.l.b16 %v783
    %v823 = vunpack.c.l.b16 %v784
    %v824 = vunpack.c.l.b16 %v785
    %v825 = vunpack.c.l.b16 %v786
    %v826 = vunpack.c.l.b16 %v787
    %v827 = vunpack.c.l.b16 %v788
    %v828 = vunpack.c.l.b16 %v789
    %v829 = vunpack.c.l.b16 %v790
    %v830 = vunpack.c.l.b16 %v791
    %v831 = vunpack.c.l.b16 %v792
    %v832 = vunpack.c.l.b16 %v793
    %v833 = vunpack.c.l.b16 %v794
    %v834 = vunpack.c.l.b16 %v795
    %v835 = vunpack.c.l.b16 %v796
    %v836 = vpack.c.b16 %v821, %v820
    %v837 = vpack.c.b16 %v823, %v822
    %v838 = vpack.c.b16 %v825, %v824
    %v839 = vpack.c.b16 %v827, %v826
    %v840 = vpack.c.b16 %v829, %v828
    %v841 = vpack.c.b16 %v831, %v830
    %v842 = vpack.c.b16 %v833, %v832
    %v843 = vpack.c.b16 %v835, %v834
    %852 = vmatprep.subr.bf16.mxu0 0
    %853 = vmatpush1.bf16.msra.mxu0 %v836
    %854 = vmatprep.subr.bf16.mxu0 0
    %855 = vmatpush1.bf16.msra.mxu0 %v837
    %856 = vmatprep.subr.bf16.mxu0 0
    %857 = vmatpush1.bf16.msra.mxu0 %v838
    %858 = vmatprep.subr.bf16.mxu0 0
    %859 = vmatpush1.bf16.msra.mxu0 %v839
    %860 = vmatprep.subr.bf16.mxu0 0
    %861 = vmatpush1.bf16.msra.mxu0 %v840
    %862 = vmatprep.subr.bf16.mxu0 0
    %863 = vmatpush1.bf16.msra.mxu0 %v841
    %864 = vmatprep.subr.bf16.mxu0 0
    %865 = vmatpush1.bf16.msra.mxu0 %v842
    %866 = vmatprep.subr.bf16.mxu0 0
    %867 = vmatpush1.bf16.msra.mxu0 %v843
    %868 = vmatprep.subr.bf16.mxu0 0
    %869 = vmatpush1.bf16.msra.mxu0 0
    %870 = vmatprep.subr.bf16.mxu0 0
    %871 = vmatpush1.bf16.msra.mxu0 0
    %872 = vmatprep.subr.bf16.mxu0 0
    %873 = vmatpush1.bf16.msra.mxu0 0
    %874 = vmatprep.subr.bf16.mxu0 0
    %875 = vmatpush1.bf16.msra.mxu0 0
    %876 = vmatprep.subr.bf16.mxu0 0
    %877 = vmatpush1.bf16.msra.mxu0 0
    %878 = vmatprep.subr.bf16.mxu0 0
    %879 = vmatpush1.bf16.msra.mxu0 0
    %880 = vmatprep.subr.bf16.mxu0 0
    %881 = vmatpush1.bf16.msra.mxu0 0
    %882 = vmatprep.subr.bf16.mxu0 0
    %883 = vmatpush1.bf16.msra.mxu0 0
    %884 = vmatprep.mubr.bf16.mxu0 0
    %885 = vmatmul.mubr.bf16.gmra.mrb[0].mxu0 %v773
    %v886 = vpop.f32.mrb[0].mxu0
    %v887 = vadd.f32 %v802, %v886
    %v888 = vpop.f32.mrb[0].mxu0
    %v889 = vpop.f32.mrb[0].mxu0
    %v890 = vadd.f32 %v802, %v889
    %v891 = vpop.f32.mrb[0].mxu0
    %892 = vmatprep.mubr.bf16.mxu0 0
    %893 = vmatmul.mubr.bf16.gmra.mrb[0].mxu0 %v774
    %v894 = vpop.f32.mrb[0].mxu0
    %v895 = vadd.f32 %v802, %v894
    %v896 = vpop.f32.mrb[0].mxu0
    %v897 = vpop.f32.mrb[0].mxu0
    %v898 = vadd.f32 %v802, %v897
    %v899 = vpop.f32.mrb[0].mxu0
    %900 = vmatprep.mubr.bf16.mxu0 0
    %901 = vmatmul.mubr.bf16.gmra.mrb[0].mxu0 %v775
    %v902 = vpop.f32.mrb[0].mxu0
    %v903 = vadd.f32 %v802, %v902
    %v904 = vpop.f32.mrb[0].mxu0
    %v905 = vpop.f32.mrb[0].mxu0
    %v906 = vadd.f32 %v802, %v905
    %v907 = vpop.f32.mrb[0].mxu0
    %908 = vmatprep.mubr.bf16.mxu0 0
    %909 = vmatmul.mubr.bf16.gmra.mrb[0].mxu0 %v776
    %v910 = vpop.f32.mrb[0].mxu0
    %v911 = vadd.f32 %v802, %v910
    %v912 = vpop.f32.mrb[0].mxu0
    %v913 = vpop.f32.mrb[0].mxu0
    %v914 = vadd.f32 %v802, %v913
    %v915 = vpop.f32.mrb[0].mxu0
    %916 = vmatprep.mubr.bf16.mxu0 0
    %917 = vmatmul.mubr.bf16.gmra.mrb[0].mxu0 %v777
    %v918 = vpop.f32.mrb[0].mxu0
    %v919 = vadd.f32 %v802, %v918
    %v920 = vpop.f32.mrb[0].mxu0
    %v921 = vpop.f32.mrb[0].mxu0
    %v922 = vadd.f32 %v802, %v921
    %v923 = vpop.f32.mrb[0].mxu0
    %924 = vmatprep.mubr.bf16.mxu0 0
    %925 = vmatmul.mubr.bf16.gmra.mrb[0].mxu0 %v778
    %v926 = vpop.f32.mrb[0].mxu0
    %v927 = vadd.f32 %v802, %v926
    %v928 = vpop.f32.mrb[0].mxu0
    %v929 = vpop.f32.mrb[0].mxu0
    %v930 = vadd.f32 %v802, %v929
    %v931 = vpop.f32.mrb[0].mxu0
    %932 = vmatprep.mubr.bf16.mxu0 0
    %933 = vmatmul.mubr.bf16.gmra.mrb[0].mxu0 %v779
    %v934 = vpop.f32.mrb[0].mxu0
    %v935 = vadd.f32 %v802, %v934
    %v936 = vpop.f32.mrb[0].mxu0
    %v937 = vpop.f32.mrb[0].mxu0
    %v938 = vadd.f32 %v802, %v937
    %v939 = vpop.f32.mrb[0].mxu0
    %940 = vmatprep.mubr.bf16.mxu0 0
    %941 = vmatmul.mubr.bf16.gmra.mrb[0].mxu0 %v780
    %v942 = vpop.f32.mrb[0].mxu0
    %v943 = vadd.f32 %v802, %v942
    %v944 = vpop.f32.mrb[0].mxu0
    %v945 = vpop.f32.mrb[0].mxu0
    %v946 = vadd.f32 %v802, %v945
    %v947 = vpop.f32.mrb[0].mxu0
    %948 = vdwg.mxu0
    %v949 = vmax.f32 %v887, 0.0
    %v950 = vmax.f32 %v890, 0.0
    %v951 = vmax.f32 %v895, 0.0
    %v952 = vmax.f32 %v898, 0.0
    %v953 = vmax.f32 %v903, 0.0
    %v954 = vmax.f32 %v906, 0.0
    %v955 = vmax.f32 %v911, 0.0
    %v956 = vmax.f32 %v914, 0.0
    %v957 = vmax.f32 %v919, 0.0
    %v958 = vmax.f32 %v922, 0.0
    %v959 = vmax.f32 %v927, 0.0
    %v960 = vmax.f32 %v930, 0.0
    %v961 = vmax.f32 %v935, 0.0
    %v962 = vmax.f32 %v938, 0.0
    %v963 = vmax.f32 %v943, 0.0
    %v964 = vmax.f32 %v946, 0.0
    %v965 = vpack.c.bf16 %v950, %v949
    %v966 = vpack.c.bf16 %v952, %v951
    %v967 = vpack.c.bf16 %v954, %v953
    %v968 = vpack.c.bf16 %v956, %v955
    %v969 = vpack.c.bf16 %v958, %v957
    %v970 = vpack.c.bf16 %v960, %v959
    %v971 = vpack.c.bf16 %v962, %v961
    %v972 = vpack.c.bf16 %v964, %v963
    %v973 = vld [vmem:[#allocation11] sm:$0xf]
    %v974 = vld [vmem:[#allocation11 + $0x4] sm:$0xf]
    %v975 = vld [vmem:[#allocation11 + $0x8] sm:$0xf]
    %v976 = vld [vmem:[#allocation11 + $0xc] sm:$0xf]
    %v977 = vld [vmem:[#allocation11 + $0x10] sm:$0xf]
    %v978 = vld [vmem:[#allocation11 + $0x14] sm:$0xf]
    %v979 = vld [vmem:[#allocation11 + $0x18] sm:$0xf]
    %v980 = vld [vmem:[#allocation11 + $0x1c] sm:$0xf]
    %v981 = vld [vmem:[#allocation11 + $0x20] sm:$0xf]
    %v982 = vld [vmem:[#allocation11 + $0x24] sm:$0xf]
    %v983 = vld [vmem:[#allocation11 + $0x28] sm:$0xf]
    %v984 = vld [vmem:[#allocation11 + $0x2c] sm:$0xf]
    %v985 = vld [vmem:[#allocation11 + $0x30] sm:$0xf]
    %v986 = vld [vmem:[#allocation11 + $0x34] sm:$0xf]
    %v987 = vld [vmem:[#allocation11 + $0x38] sm:$0xf]
    %v988 = vld [vmem:[#allocation11 + $0x3c] sm:$0xf]
    %v989 = vld [vmem:[%s10] sm:$0x1]
    %v991 = vlaneseq
    %v992 = vshrl.u32 %v991, 7
    %v993 = vsub.s32 0, %v992
    %v994 = vrot.slane %v989, %v993
    %v1012 = vunpack.c.l.b16 %v973
    %v1013 = vunpack.c.l.b16 %v974
    %v1014 = vunpack.c.l.b16 %v975
    %v1015 = vunpack.c.l.b16 %v976
    %v1016 = vunpack.c.l.b16 %v977
    %v1017 = vunpack.c.l.b16 %v978
    %v1018 = vunpack.c.l.b16 %v979
    %v1019 = vunpack.c.l.b16 %v980
    %v1020 = vunpack.c.l.b16 %v981
    %v1021 = vunpack.c.l.b16 %v982
    %v1022 = vunpack.c.l.b16 %v983
    %v1023 = vunpack.c.l.b16 %v984
    %v1024 = vunpack.c.l.b16 %v985
    %v1025 = vunpack.c.l.b16 %v986
    %v1026 = vunpack.c.l.b16 %v987
    %v1027 = vunpack.c.l.b16 %v988
    %v1028 = vpack.c.b16 %v1013, %v1012
    %v1029 = vpack.c.b16 %v1015, %v1014
    %v1030 = vpack.c.b16 %v1017, %v1016
    %v1031 = vpack.c.b16 %v1019, %v1018
    %v1032 = vpack.c.b16 %v1021, %v1020
    %v1033 = vpack.c.b16 %v1023, %v1022
    %v1034 = vpack.c.b16 %v1025, %v1024
    %v1035 = vpack.c.b16 %v1027, %v1026
    %1044 = vmatprep.subr.bf16.mxu0 0
    %1045 = vmatpush1.bf16.msra.mxu0 %v1028
    %1046 = vmatprep.subr.bf16.mxu0 0
    %1047 = vmatpush1.bf16.msra.mxu0 %v1029
    %1048 = vmatprep.subr.bf16.mxu0 0
    %1049 = vmatpush1.bf16.msra.mxu0 %v1030
    %1050 = vmatprep.subr.bf16.mxu0 0
    %1051 = vmatpush1.bf16.msra.mxu0 %v1031
    %1052 = vmatprep.subr.bf16.mxu0 0
    %1053 = vmatpush1.bf16.msra.mxu0 %v1032
    %1054 = vmatprep.subr.bf16.mxu0 0
    %1055 = vmatpush1.bf16.msra.mxu0 %v1033
    %1056 = vmatprep.subr.bf16.mxu0 0
    %1057 = vmatpush1.bf16.msra.mxu0 %v1034
    %1058 = vmatprep.subr.bf16.mxu0 0
    %1059 = vmatpush1.bf16.msra.mxu0 %v1035
    %1060 = vmatprep.subr.bf16.mxu0 0
    %1061 = vmatpush1.bf16.msra.mxu0 0
    %1062 = vmatprep.subr.bf16.mxu0 0
    %1063 = vmatpush1.bf16.msra.mxu0 0
    %1064 = vmatprep.subr.bf16.mxu0 0
    %1065 = vmatpush1.bf16.msra.mxu0 0
    %1066 = vmatprep.subr.bf16.mxu0 0
    %1067 = vmatpush1.bf16.msra.mxu0 0
    %1068 = vmatprep.subr.bf16.mxu0 0
    %1069 = vmatpush1.bf16.msra.mxu0 0
    %1070 = vmatprep.subr.bf16.mxu0 0
    %1071 = vmatpush1.bf16.msra.mxu0 0
    %1072 = vmatprep.subr.bf16.mxu0 0
    %1073 = vmatpush1.bf16.msra.mxu0 0
    %1074 = vmatprep.subr.bf16.mxu0 0
    %1075 = vmatpush1.bf16.msra.mxu0 0
    %1076 = vmatprep.mubr.bf16.mxu0 0
    %1077 = vmatmul.mubr.bf16.gmra.mrb[0].mxu0 %v965
    %v1078 = vpop.f32.mrb[0].mxu0
    %v1079 = vadd.f32 %v994, %v1078
    %v1080 = vpop.f32.mrb[0].mxu0
    %v1081 = vpop.f32.mrb[0].mxu0
    %v1082 = vadd.f32 %v994, %v1081
    %v1083 = vpop.f32.mrb[0].mxu0
    %1084 = vmatprep.mubr.bf16.mxu0 0
    %1085 = vmatmul.mubr.bf16.gmra.mrb[0].mxu0 %v966
    %v1086 = vpop.f32.mrb[0].mxu0
    %v1087 = vadd.f32 %v994, %v1086
    %v1088 = vpop.f32.mrb[0].mxu0
    %v1089 = vpop.f32.mrb[0].mxu0
    %v1090 = vadd.f32 %v994, %v1089
    %v1091 = vpop.f32.mrb[0].mxu0
    %1092 = vmatprep.mubr.bf16.mxu0 0
    %1093 = vmatmul.mubr.bf16.gmra.mrb[0].mxu0 %v967
    %v1094 = vpop.f32.mrb[0].mxu0
    %v1095 = vadd.f32 %v994, %v1094
    %v1096 = vpop.f32.mrb[0].mxu0
    %v1097 = vpop.f32.mrb[0].mxu0
    %v1098 = vadd.f32 %v994, %v1097
    %v1099 = vpop.f32.mrb[0].mxu0
    %1100 = vmatprep.mubr.bf16.mxu0 0
    %1101 = vmatmul.mubr.bf16.gmra.mrb[0].mxu0 %v968
    %v1102 = vpop.f32.mrb[0].mxu0
    %v1103 = vadd.f32 %v994, %v1102
    %v1104 = vpop.f32.mrb[0].mxu0
    %v1105 = vpop.f32.mrb[0].mxu0
    %v1106 = vadd.f32 %v994, %v1105
    %v1107 = vpop.f32.mrb[0].mxu0
    %1108 = vmatprep.mubr.bf16.mxu0 0
    %1109 = vmatmul.mubr.bf16.gmra.mrb[0].mxu0 %v969
    %v1110 = vpop.f32.mrb[0].mxu0
    %v1111 = vadd.f32 %v994, %v1110
    %v1112 = vpop.f32.mrb[0].mxu0
    %v1113 = vpop.f32.mrb[0].mxu0
    %v1114 = vadd.f32 %v994, %v1113
    %v1115 = vpop.f32.mrb[0].mxu0
    %1116 = vmatprep.mubr.bf16.mxu0 0
    %1117 = vmatmul.mubr.bf16.gmra.mrb[0].mxu0 %v970
    %v1118 = vpop.f32.mrb[0].mxu0
    %v1119 = vadd.f32 %v994, %v1118
    %v1120 = vpop.f32.mrb[0].mxu0
    %v1121 = vpop.f32.mrb[0].mxu0
    %v1122 = vadd.f32 %v994, %v1121
    %v1123 = vpop.f32.mrb[0].mxu0
    %1124 = vmatprep.mubr.bf16.mxu0 0
    %1125 = vmatmul.mubr.bf16.gmra.mrb[0].mxu0 %v971
    %v1126 = vpop.f32.mrb[0].mxu0
    %v1127 = vadd.f32 %v994, %v1126
    %v1128 = vpop.f32.mrb[0].mxu0
    %v1129 = vpop.f32.mrb[0].mxu0
    %v1130 = vadd.f32 %v994, %v1129
    %v1131 = vpop.f32.mrb[0].mxu0
    %1132 = vmatprep.mubr.bf16.mxu0 0
    %1133 = vmatmul.mubr.bf16.gmra.mrb[0].mxu0 %v972
    %v1134 = vpop.f32.mrb[0].mxu0
    %v1135 = vadd.f32 %v994, %v1134
    %v1136 = vpop.f32.mrb[0].mxu0
    %v1137 = vpop.f32.mrb[0].mxu0
    %v1138 = vadd.f32 %v994, %v1137
    %v1139 = vpop.f32.mrb[0].mxu0
    %1140 = vdwg.mxu0
    %v1141 = vmax.f32 %v1079, 0.0
    %v1142 = vmax.f32 %v1082, 0.0
    %v1143 = vmax.f32 %v1087, 0.0
    %v1144 = vmax.f32 %v1090, 0.0
    %v1145 = vmax.f32 %v1095, 0.0
    %v1146 = vmax.f32 %v1098, 0.0
    %v1147 = vmax.f32 %v1103, 0.0
    %v1148 = vmax.f32 %v1106, 0.0
    %v1149 = vmax.f32 %v1111, 0.0
    %v1150 = vmax.f32 %v1114, 0.0
    %v1151 = vmax.f32 %v1119, 0.0
    %v1152 = vmax.f32 %v1122, 0.0
    %v1153 = vmax.f32 %v1127, 0.0
    %v1154 = vmax.f32 %v1130, 0.0
    %v1155 = vmax.f32 %v1135, 0.0
    %v1156 = vmax.f32 %v1138, 0.0
    %v1157 = vpack.c.bf16 %v1142, %v1141
    %v1158 = vpack.c.bf16 %v1144, %v1143
    %v1159 = vpack.c.bf16 %v1146, %v1145
    %v1160 = vpack.c.bf16 %v1148, %v1147
    %v1161 = vpack.c.bf16 %v1150, %v1149
    %v1162 = vpack.c.bf16 %v1152, %v1151
    %v1163 = vpack.c.bf16 %v1154, %v1153
    %v1164 = vpack.c.bf16 %v1156, %v1155
    %v1165 = vld [vmem:[#allocation13] sm:$0xf]
    %v1166 = vld [vmem:[#allocation13 + $0x4] sm:$0xf]
    %v1167 = vld [vmem:[#allocation13 + $0x8] sm:$0xf]
    %v1168 = vld [vmem:[#allocation13 + $0xc] sm:$0xf]
    %v1169 = vld [vmem:[#allocation13 + $0x10] sm:$0xf]
    %v1170 = vld [vmem:[#allocation13 + $0x14] sm:$0xf]
    %v1171 = vld [vmem:[#allocation13 + $0x18] sm:$0xf]
    %v1172 = vld [vmem:[#allocation13 + $0x1c] sm:$0xf]
    %v1173 = vld [vmem:[#allocation13 + $0x20] sm:$0xf]
    %v1174 = vld [vmem:[#allocation13 + $0x24] sm:$0xf]
    %v1175 = vld [vmem:[#allocation13 + $0x28] sm:$0xf]
    %v1176 = vld [vmem:[#allocation13 + $0x2c] sm:$0xf]
    %v1177 = vld [vmem:[#allocation13 + $0x30] sm:$0xf]
    %v1178 = vld [vmem:[#allocation13 + $0x34] sm:$0xf]
    %v1179 = vld [vmem:[#allocation13 + $0x38] sm:$0xf]
    %v1180 = vld [vmem:[#allocation13 + $0x3c] sm:$0xf]
    %v1181 = vld [vmem:[%s12] sm:$0x1]
    %v1183 = vlaneseq
    %v1184 = vshrl.u32 %v1183, 7
    %v1185 = vsub.s32 0, %v1184
    %v1186 = vrot.slane %v1181, %v1185
    %v1204 = vunpack.c.l.b16 %v1165
    %v1205 = vunpack.c.l.b16 %v1166
    %v1206 = vunpack.c.l.b16 %v1167
    %v1207 = vunpack.c.l.b16 %v1168
    %v1208 = vunpack.c.l.b16 %v1169
    %v1209 = vunpack.c.l.b16 %v1170
    %v1210 = vunpack.c.l.b16 %v1171
    %v1211 = vunpack.c.l.b16 %v1172
    %v1212 = vunpack.c.l.b16 %v1173
    %v1213 = vunpack.c.l.b16 %v1174
    %v1214 = vunpack.c.l.b16 %v1175
    %v1215 = vunpack.c.l.b16 %v1176
    %v1216 = vunpack.c.l.b16 %v1177
    %v1217 = vunpack.c.l.b16 %v1178
    %v1218 = vunpack.c.l.b16 %v1179
    %v1219 = vunpack.c.l.b16 %v1180
    %v1220 = vpack.c.b16 %v1205, %v1204
    %v1221 = vpack.c.b16 %v1207, %v1206
    %v1222 = vpack.c.b16 %v1209, %v1208
    %v1223 = vpack.c.b16 %v1211, %v1210
    %v1224 = vpack.c.b16 %v1213, %v1212
    %v1225 = vpack.c.b16 %v1215, %v1214
    %v1226 = vpack.c.b16 %v1217, %v1216
    %v1227 = vpack.c.b16 %v1219, %v1218
    %1236 = vmatprep.subr.bf16.mxu0 0
    %1237 = vmatpush1.bf16.msra.mxu0 %v1220
    %1238 = vmatprep.subr.bf16.mxu0 0
    %1239 = vmatpush1.bf16.msra.mxu0 %v1221
    %1240 = vmatprep.subr.bf16.mxu0 0
    %1241 = vmatpush1.bf16.msra.mxu0 %v1222
    %1242 = vmatprep.subr.bf16.mxu0 0
    %1243 = vmatpush1.bf16.msra.mxu0 %v1223
    %1244 = vmatprep.subr.bf16.mxu0 0
    %1245 = vmatpush1.bf16.msra.mxu0 %v1224
    %1246 = vmatprep.subr.bf16.mxu0 0
    %1247 = vmatpush1.bf16.msra.mxu0 %v1225
    %1248 = vmatprep.subr.bf16.mxu0 0
    %1249 = vmatpush1.bf16.msra.mxu0 %v1226
    %1250 = vmatprep.subr.bf16.mxu0 0
    %1251 = vmatpush1.bf16.msra.mxu0 %v1227
    %1252 = vmatprep.subr.bf16.mxu0 0
    %1253 = vmatpush1.bf16.msra.mxu0 0
    %1254 = vmatprep.subr.bf16.mxu0 0
    %1255 = vmatpush1.bf16.msra.mxu0 0
    %1256 = vmatprep.subr.bf16.mxu0 0
    %1257 = vmatpush1.bf16.msra.mxu0 0
    %1258 = vmatprep.subr.bf16.mxu0 0
    %1259 = vmatpush1.bf16.msra.mxu0 0
    %1260 = vmatprep.subr.bf16.mxu0 0
    %1261 = vmatpush1.bf16.msra.mxu0 0
    %1262 = vmatprep.subr.bf16.mxu0 0
    %1263 = vmatpush1.bf16.msra.mxu0 0
    %1264 = vmatprep.subr.bf16.mxu0 0
    %1265 = vmatpush1.bf16.msra.mxu0 0
    %1266 = vmatprep.subr.bf16.mxu0 0
    %1267 = vmatpush1.bf16.msra.mxu0 0
    %1268 = vmatprep.mubr.bf16.mxu0 0
    %1269 = vmatmul.mubr.bf16.gmra.mrb[0].mxu0 %v1157
    %v1270 = vpop.f32.mrb[0].mxu0
    %v1271 = vadd.f32 %v1186, %v1270
    %v1272 = vpop.f32.mrb[0].mxu0
    %v1273 = vpop.f32.mrb[0].mxu0
    %v1274 = vadd.f32 %v1186, %v1273
    %v1275 = vpop.f32.mrb[0].mxu0
    %1276 = vmatprep.mubr.bf16.mxu0 0
    %1277 = vmatmul.mubr.bf16.gmra.mrb[0].mxu0 %v1158
    %v1278 = vpop.f32.mrb[0].mxu0
    %v1279 = vadd.f32 %v1186, %v1278
    %v1280 = vpop.f32.mrb[0].mxu0
    %v1281 = vpop.f32.mrb[0].mxu0
    %v1282 = vadd.f32 %v1186, %v1281
    %v1283 = vpop.f32.mrb[0].mxu0
    %1284 = vmatprep.mubr.bf16.mxu0 0
    %1285 = vmatmul.mubr.bf16.gmra.mrb[0].mxu0 %v1159
    %v1286 = vpop.f32.mrb[0].mxu0
    %v1287 = vadd.f32 %v1186, %v1286
    %v1288 = vpop.f32.mrb[0].mxu0
    %v1289 = vpop.f32.mrb[0].mxu0
    %v1290 = vadd.f32 %v1186, %v1289
    %v1291 = vpop.f32.mrb[0].mxu0
    %1292 = vmatprep.mubr.bf16.mxu0 0
    %1293 = vmatmul.mubr.bf16.gmra.mrb[0].mxu0 %v1160
    %v1294 = vpop.f32.mrb[0].mxu0
    %v1295 = vadd.f32 %v1186, %v1294
    %v1296 = vpop.f32.mrb[0].mxu0
    %v1297 = vpop.f32.mrb[0].mxu0
    %v1298 = vadd.f32 %v1186, %v1297
    %v1299 = vpop.f32.mrb[0].mxu0
    %1300 = vmatprep.mubr.bf16.mxu0 0
    %1301 = vmatmul.mubr.bf16.gmra.mrb[0].mxu0 %v1161
    %v1302 = vpop.f32.mrb[0].mxu0
    %v1303 = vadd.f32 %v1186, %v1302
    %v1304 = vpop.f32.mrb[0].mxu0
    %v1305 = vpop.f32.mrb[0].mxu0
    %v1306 = vadd.f32 %v1186, %v1305
    %v1307 = vpop.f32.mrb[0].mxu0
    %1308 = vmatprep.mubr.bf16.mxu0 0
    %1309 = vmatmul.mubr.bf16.gmra.mrb[0].mxu0 %v1162
    %v1310 = vpop.f32.mrb[0].mxu0
    %v1311 = vadd.f32 %v1186, %v1310
    %v1312 = vpop.f32.mrb[0].mxu0
    %v1313 = vpop.f32.mrb[0].mxu0
    %v1314 = vadd.f32 %v1186, %v1313
    %v1315 = vpop.f32.mrb[0].mxu0
    %1316 = vmatprep.mubr.bf16.mxu0 0
    %1317 = vmatmul.mubr.bf16.gmra.mrb[0].mxu0 %v1163
    %v1318 = vpop.f32.mrb[0].mxu0
    %v1319 = vadd.f32 %v1186, %v1318
    %v1320 = vpop.f32.mrb[0].mxu0
    %v1321 = vpop.f32.mrb[0].mxu0
    %v1322 = vadd.f32 %v1186, %v1321
    %v1323 = vpop.f32.mrb[0].mxu0
    %1324 = vmatprep.mubr.bf16.mxu0 0
    %1325 = vmatmul.mubr.bf16.gmra.mrb[0].mxu0 %v1164
    %v1326 = vpop.f32.mrb[0].mxu0
    %v1327 = vadd.f32 %v1186, %v1326
    %v1328 = vpop.f32.mrb[0].mxu0
    %v1329 = vpop.f32.mrb[0].mxu0
    %v1330 = vadd.f32 %v1186, %v1329
    %v1331 = vpop.f32.mrb[0].mxu0
    %1332 = vdwg.mxu0
    %1333 = vst [vmem:[#allocation14] sm:$0xff] %v1271
    %1334 = vst [vmem:[#allocation14 + $0x8] sm:$0xff] %v1274
    %1335 = vst [vmem:[#allocation14 + $0x10] sm:$0xff] %v1279
    %1336 = vst [vmem:[#allocation14 + $0x18] sm:$0xff] %v1282
    %1337 = vst [vmem:[#allocation14 + $0x20] sm:$0xff] %v1287
    %1338 = vst [vmem:[#allocation14 + $0x28] sm:$0xff] %v1290
    %1339 = vst [vmem:[#allocation14 + $0x30] sm:$0xff] %v1295
    %1340 = vst [vmem:[#allocation14 + $0x38] sm:$0xff] %v1298
    %1341 = vst [vmem:[#allocation14 + $0x40] sm:$0xff] %v1303
    %1342 = vst [vmem:[#allocation14 + $0x48] sm:$0xff] %v1306
    %1343 = vst [vmem:[#allocation14 + $0x50] sm:$0xff] %v1311
    %1344 = vst [vmem:[#allocation14 + $0x58] sm:$0xff] %v1314
    %1345 = vst [vmem:[#allocation14 + $0x60] sm:$0xff] %v1319
    %1346 = vst [vmem:[#allocation14 + $0x68] sm:$0xff] %v1322
    %1347 = vst [vmem:[#allocation14 + $0x70] sm:$0xff] %v1327
    %1348 = vst [vmem:[#allocation14 + $0x78] sm:$0xff] %v1330
    // Predicated region
    $region82: #{tpu_custom_call.1} parent=1 // pred_check
      _
    $region83: #{tpu_custom_call.1} parent=1 // pred_check_branch
      %1350 = sbr.rel (0) target = $region85
    $region84: #{tpu_custom_call.1} parent=1 // pred_region
      %s1352 = ssub.s32 2048, 2048
      %1353 = vsyncadd [#allocation4], %s1352
      %s1354 = sshll.u32 [#allocation14], 4
      %s1355 = int_to_ptr.vmem [resolvable:$true] %s1354
      %1360 = dma.vmem_to_hbm [thread:$0]  %s1355, 2048, %s13, [#allocation4], 128, 128, 8
    $region85: #{tpu_custom_call.1} parent=1 // pred_fallthru
      _
    // Predicated region
    $region86: #{tpu_custom_call.1} parent=1 // pred_check
      _
    $region87: #{tpu_custom_call.1} parent=1 // pred_check_branch
      %1362 = sbr.rel (0) target = $region89
    $region88: #{tpu_custom_call.1} parent=1 // pred_region
      %1363 = dma.done [#allocation4], 2048
    $region89: #{tpu_custom_call.1} parent=1 // pred_fallthru
      _
    %1364 = vsyncpa [#allocation3], 1
    %1365 = vsyncpa [#allocation6], 1
    %1366 = vsyncpa [#allocation9], 1
    %1367 = vsyncpa [#allocation12], 1
    %1368 = vsyncpa [#allocation4], 1

</llo_original>
